<compile_context>
chip_gen: v5e
topology: v5e:2x2
jax: 0.10.0
libtpu: 0.0.40
codegen_flags: <defaults>
</compile_context>

<pallas_src>
import functools

import jax
import jax.numpy as jnp
import numpy as np
from jax.experimental import pallas as pl
from jax.experimental.pallas import tpu as pltpu


def _round_up(x, m):
    return (x + m - 1) // m * m


def _pad_gate_cols(w, H, H_pad):
    """Pad the trailing 3H gate axis per gate (r|z|n) to 3*H_pad with zeros."""
    lead = w.shape[:-1]
    w3 = w.reshape(*lead, 3, H)
    pad = [(0, 0)] * len(lead) + [(0, 0), (0, H_pad - H)]
    return jnp.pad(w3, pad).reshape(*lead, 3 * H_pad)


def _gru_recurrence_kernel(gi_ref, h0_ref, whh_ref, bhn_ref,
                           hseq_ref, hfinal_ref, h_scratch,
                           *, tt, t_actual, unroll):
    """One grid step = `tt` GRU time steps on a (B_tile, H) carried hidden state.

    grid = (batch_blocks [parallel], time_chunks [arbitrary/sequential]).
    """
    c = pl.program_id(1)                                   # time-chunk index
    H = h0_ref.shape[-1]

    @pl.when(c == 0)
    def _():
        h_scratch[...] = h0_ref[...]

    # Hoist loop-invariant loads / broadcasts out of the unrolled time loop.
    w_hh = whh_ref[...]                                    # (H, 3H), f32 or bf16
    b_hn = jnp.broadcast_to(bhn_ref[...], h0_ref.shape)    # (B_tile, H), f32

    def step(i, h_prev):
        # gi streamed in matmul_dtype; upcast once, gate math in f32.
        gi = gi_ref[i].astype(jnp.float32)                 # (B_tile, 3H)
        gh = jnp.dot(h_prev.astype(w_hh.dtype), w_hh,
                     preferred_element_type=jnp.float32)   # (B_tile, 3H) f32
        # Fused sigmoid over the lane-aligned (B, 2H) r|z slab.
        rz = jax.nn.sigmoid(gi[:, 0:2 * H] + gh[:, 0:2 * H])
        r = rz[:, 0:H]
        z = rz[:, H:2 * H]
        n = jnp.tanh(gi[:, 2 * H:3 * H] + r * (gh[:, 2 * H:3 * H] + b_hn))
        h_new = n + z * (h_prev - n)                       # == (1-z)*n + z*h_prev
        if t_actual % tt != 0:                             # static: only when T was padded
            h_new = jnp.where(c * tt + i < t_actual, h_new, h_prev)
        hseq_ref[i] = h_new.astype(hseq_ref.dtype)
        return h_new

    h_last = jax.lax.fori_loop(0, tt, step, h_scratch[...], unroll=unroll)
    h_scratch[...] = h_last

    @pl.when(c == pl.num_programs(1) - 1)
    def _():
        hfinal_ref[...] = h_last


@functools.partial(jax.jit, static_argnames=("matmul_dtype", "time_chunk"))
def decoder_rnn_forward(input_index, hidden, params,
                        matmul_dtype=jnp.bfloat16, time_chunk=32):
    """Pallas implementation of DecoderRNN.forward.

    input_index: (B, T) int32 token ids
    hidden:      (1, B, H) float32
    returns (output (B, T, O), hidden (1, B, H)) -- PyTorch batch_first layout.
    """
    emb_w = params["embedding"]          # (O, H)
    wih_t = params["w_ih_t"]             # (H, 3H) = weight_ih_l0.T
    whh_t = params["w_hh_t"]             # (H, 3H) = weight_hh_l0.T
    b_ih = params["b_ih"]                # (1, 3H)
    b_hh = params["b_hh"]                # (1, 3H)
    wout_t = params["w_out_t"]           # (H, O)  = out.weight.T
    b_out = params["b_out"]              # (1, O)

    B, T = input_index.shape
    O, H = emb_w.shape
    f32 = jnp.float32
    mm_bytes = np.dtype(matmul_dtype).itemsize

    # Pad to TPU-friendly shapes: batch -> sublane multiple, features -> lane multiple.
    H_p = _round_up(H, 128)
    O_p = _round_up(O, 128)
    B_p = _round_up(B, 8)
    # Split batch into 2 blocks when possible so v7x megacore can shard it.
    if B_p >= 16:
        B_tile = _round_up(pl.cdiv(B_p, 2), 8)
        B_p = 2 * B_tile
    else:
        B_tile = B_p
    n_batch_blocks = B_p // B_tile

    # Size the time chunk so the pipeline fits a v7x-safe VMEM budget.
    def _vmem_estimate(tt_):
        return (2 * tt_ * B_tile * 3 * H_p * mm_bytes      # gi (double-buffered)
                + 2 * tt_ * B_tile * H_p * mm_bytes        # h_seq (double-buffered)
                + H_p * 3 * H_p * mm_bytes                 # W_hh (Buffered(1))
                + 8 * H_p * 4                              # b_hn (Buffered(1))
                + 2 * B_tile * H_p * 4                     # h0
                + 2 * B_tile * H_p * 4                     # h_final
                + B_tile * H_p * 4)                        # scratch

    vmem_budget = 40 * 1024 * 1024
    tt = max(1, min(time_chunk, T))
    while tt > 1 and _vmem_estimate(tt) > vmem_budget:
        tt = max(1, tt // 2)
    T_p = _round_up(T, tt)
    vmem_limit = int(min(48 * 1024 * 1024,
                         max(32 * 1024 * 1024, _vmem_estimate(tt) + 8 * 1024 * 1024)))
    unroll = min(8, tt)   # partial unroll: LLO visibility without vreg spills at large H

    # Zero padding keeps the padded hidden lanes exactly zero through the
    # recurrence (padded gates give r = z = 0.5, n = 0 => h stays 0); padded
    # W_out rows are zero so padded lanes never leak into logits.
    emb_p = jnp.pad(emb_w.astype(f32), ((0, 0), (0, H_p - H)))
    wih_p = jnp.pad(_pad_gate_cols(wih_t.astype(f32), H, H_p), ((0, H_p - H), (0, 0)))
    whh_p = jnp.pad(_pad_gate_cols(whh_t.astype(f32), H, H_p), ((0, H_p - H), (0, 0)))
    bih_p = _pad_gate_cols(b_ih.astype(f32), H, H_p)
    bhh_p = _pad_gate_cols(b_hh.astype(f32), H, H_p)
    wout_p = jnp.pad(wout_t.astype(f32), ((0, H_p - H), (0, O_p - O)))
    bout_p = jnp.pad(b_out.astype(f32), ((0, 0), (0, O_p - O)))

    # ---- Hoisted input projection: gather + ReLU time-major, one big GEMM ----
    x = jnp.maximum(jnp.take(emb_p, input_index.T, axis=0), 0.0)          # (T, B, H_p)
    # Fold b_hh's r/z parts into the input-side bias; the n-gate hidden bias must
    # stay inside r * (.) so it is passed to the kernel separately.
    gi_bias = bih_p + jnp.concatenate(
        [bhh_p[:, :2 * H_p], jnp.zeros((1, H_p), f32)], axis=1)           # (1, 3H_p)
    gi = (jnp.dot(x.reshape(T * B, H_p).astype(matmul_dtype),
                  wih_p.astype(matmul_dtype),
                  preferred_element_type=jnp.float32) + gi_bias
          ).astype(matmul_dtype)                                          # (T*B, 3H_p)
    gi = jnp.pad(gi.reshape(T, B, 3 * H_p), ((0, T_p - T), (0, B_p - B), (0, 0)))

    h0 = jnp.pad(hidden[0].astype(f32), ((0, B_p - B), (0, H_p - H)))     # (B_p, H_p)
    whh_k = whh_p.astype(matmul_dtype)        # only resident weight of the recurrent kernel
    b_hn = bhh_p[:, 2 * H_p:3 * H_p]          # (1, H_p), kept f32 for gate math

    kernel = functools.partial(_gru_recurrence_kernel,
                               tt=tt, t_actual=T, unroll=unroll)
    grid_spec = pltpu.PrefetchScalarGridSpec(
        num_scalar_prefetch=0,
        grid=(n_batch_blocks, T_p // tt),
        in_specs=[
            # gi, time-chunked + batch-blocked (the only large streamed operand).
            pl.BlockSpec((tt, B_tile, 3 * H_p), lambda b, c: (c, b, 0)),
            # h0 (tiny, read once per batch block).
            pl.BlockSpec((B_tile, H_p), lambda b, c: (b, 0)),
            # Resident constants: single-buffered, never re-DMA'd.
            pl.BlockSpec((H_p, 3 * H_p), lambda b, c: (0, 0),
                         pipeline_mode=pl.Buffered(1)),
            pl.BlockSpec((1, H_p), lambda b, c: (0, 0),
                         pipeline_mode=pl.Buffered(1)),
        ],
        out_specs=[
            pl.BlockSpec((tt, B_tile, H_p), lambda b, c: (c, b, 0)),      # h_seq
            pl.BlockSpec((B_tile, H_p), lambda b, c: (b, 0)),             # final hidden
        ],
        scratch_shapes=[pltpu.VMEM((B_tile, H_p), jnp.float32)],          # carried hidden
    )
    h_seq, h_final = pl.pallas_call(
        kernel,
        out_shape=(
            jax.ShapeDtypeStruct((T_p, B_p, H_p), matmul_dtype),
            jax.ShapeDtypeStruct((B_p, H_p), jnp.float32),
        ),
        grid_spec=grid_spec,
        compiler_params=pltpu.CompilerParams(
            dimension_semantics=("parallel", "arbitrary"),   # batch || , time sequential
            vmem_limit_bytes=vmem_limit,
        ),
    )(gi, h0, whh_k, b_hn)

    # ---- Hoisted output projection: one GEMM over the padded slab (free reshape,
    # no relayout); slice the real rows afterwards. ----
    h_flat = h_seq.reshape(T_p * B_p, H_p)
    logits = jnp.dot(h_flat.astype(matmul_dtype), wout_p.astype(matmul_dtype),
                     preferred_element_type=jnp.float32) + bout_p
    output = jnp.transpose(
        logits.reshape(T_p, B_p, O_p)[:T, :B, :O], (1, 0, 2))             # (B, T, O)
    hidden_out = h_final[:B, :H][None]                                    # (1, B, H)
    return output, hidden_out


def make_params(key, hidden_size, output_size):
    ks = jax.random.split(key, 7)
    H, O = hidden_size, output_size
    s = 1.0 / np.sqrt(H)
    return {
        "embedding": jax.random.normal(ks[0], (O, H), jnp.float32),
        "w_ih_t": jax.random.uniform(ks[1], (H, 3 * H), jnp.float32, -s, s),
        "w_hh_t": jax.random.uniform(ks[2], (H, 3 * H), jnp.float32, -s, s),
        "b_ih": jax.random.uniform(ks[3], (1, 3 * H), jnp.float32, -s, s),
        "b_hh": jax.random.uniform(ks[4], (1, 3 * H), jnp.float32, -s, s),
        "w_out_t": jax.random.uniform(ks[5], (H, O), jnp.float32, -s, s),
        "b_out": jax.random.uniform(ks[6], (1, O), jnp.float32, -s, s),
    }


def _reference_forward(input_index, hidden, params):
    """Pure-JAX f32 reference (PyTorch GRU semantics) for correctness checks."""
    emb = jnp.maximum(params["embedding"][input_index], 0.0)  # (B, T, H)
    H = emb.shape[-1]
    h = hidden[0]

    def step(h_prev, x_t):
        gi = x_t @ params["w_ih_t"] + params["b_ih"]
        gh = h_prev @ params["w_hh_t"] + params["b_hh"]
        i_r, i_z, i_n = gi[:, :H], gi[:, H:2 * H], gi[:, 2 * H:]
        h_r, h_z, h_n = gh[:, :H], gh[:, H:2 * H], gh[:, 2 * H:]
        r = jax.nn.sigmoid(i_r + h_r)
        z = jax.nn.sigmoid(i_z + h_z)
        n = jnp.tanh(i_n + r * h_n)
        h_new = (1.0 - z) * n + z * h_prev
        return h_new, h_new

    h_last, hs = jax.lax.scan(step, h, jnp.transpose(emb, (1, 0, 2)))
    hs = jnp.transpose(hs, (1, 0, 2))                       # (B, T, H)
    out = hs @ params["w_out_t"] + params["b_out"]
    return out, h_last[None]


if __name__ == "__main__":
    B, T, HIDDEN, VOCAB = 2, 8, 32, 64

    key = jax.random.PRNGKey(0)
    k_param, k_idx, k_hid = jax.random.split(key, 3)

    params = make_params(k_param, HIDDEN, VOCAB)
    input_index = jax.random.randint(k_idx, (B, T), 0, VOCAB, dtype=jnp.int32)
    hidden0 = jax.random.normal(k_hid, (1, B, HIDDEN), jnp.float32)

    ref_out, ref_h = _reference_forward(input_index, hidden0, params)

    # Exact-ish path: f32 matmul operands / f32 gi stream.
    out32, h32 = decoder_rnn_forward(input_index, hidden0, params,
                                     matmul_dtype=jnp.float32)
    out32 = jax.block_until_ready(out32)
    h32 = jax.block_until_ready(h32)
    np.testing.assert_allclose(np.asarray(out32), np.asarray(ref_out), rtol=1e-4, atol=1e-4)
    np.testing.assert_allclose(np.asarray(h32), np.asarray(ref_h), rtol=1e-4, atol=1e-4)

    # Fast path: bf16 matmul operands + bf16 gi/h_seq streams, f32 gate math /
    # hidden carry (loose check).
    outbf, hbf = decoder_rnn_forward(input_index, hidden0, params,
                                     matmul_dtype=jnp.bfloat16)
    outbf = jax.block_until_ready(outbf)
    hbf = jax.block_until_ready(hbf)
    np.testing.assert_allclose(np.asarray(outbf), np.asarray(ref_out), rtol=1e-1, atol=1e-1)
    np.testing.assert_allclose(np.asarray(hbf), np.asarray(ref_h), rtol=1e-1, atol=1e-1)

    print("KERNEL_OK")
</pallas_src>

<mosaic_0001>
module attributes {stable_mosaic.version = 11 : i64} {
  func.func @_gru_recurrence_kernel(%arg0: i32, %arg1: i32, %arg2: memref<8x8x384xf32, #tpu.memory_space<vmem>>, %arg3: memref<8x128xf32, #tpu.memory_space<vmem>>, %arg4: memref<128x384xf32, #tpu.memory_space<vmem>>, %arg5: memref<1x128xf32, #tpu.memory_space<vmem>>, %arg6: memref<8x8x128xf32, #tpu.memory_space<vmem>>, %arg7: memref<8x128xf32, #tpu.memory_space<vmem>>, %arg8: memref<8x128xf32, #tpu.memory_space<vmem>>) attributes {dimension_semantics = [#tpu.dimension_semantics<parallel>, #tpu.dimension_semantics<arbitrary>], iteration_bounds = array<i64: 1, 1>, scalar_prefetch = 0 : i64, scratch_operands = 1 : i64, tpu.core_type = #tpu.core_type<tc>, window_params = [{transform_indices = @transform_0, window_bounds = array<i64: 8, 8, 384>}, {transform_indices = @transform_1, window_bounds = array<i64: 8, 128>}, {pipeline_mode = #tpu.pipeline_mode<synchronous>, transform_indices = @transform_2, window_bounds = array<i64: 128, 384>}, {pipeline_mode = #tpu.pipeline_mode<synchronous>, transform_indices = @transform_3, window_bounds = array<i64: 1, 128>}, {transform_indices = @transform_4, window_bounds = array<i64: 8, 8, 128>}, {transform_indices = @transform_5, window_bounds = array<i64: 8, 128>}]} {
    %c0_i32 = arith.constant 0 : i32
    %0 = arith.cmpi eq, %arg1, %c0_i32 : i32
    %1 = arith.extui %0 : i1 to i32
    %c0_i32_0 = arith.constant 0 : i32
    %2 = arith.cmpi ne, %1, %c0_i32_0 : i32
    scf.if %2 {
      %c0_58 = arith.constant 0 : index
      %c0_59 = arith.constant 0 : index
      %228 = vector.load %arg3[%c0_58, %c0_59] : memref<8x128xf32, #tpu.memory_space<vmem>>, vector<8x128xf32>
      %c0_60 = arith.constant 0 : index
      %c0_61 = arith.constant 0 : index
      %229 = vector.load %arg8[%c0_60, %c0_61] : memref<8x128xf32, #tpu.memory_space<vmem>>, vector<8x128xf32>
      tpu.vector_store %arg8[%c0_60, %c0_61], %228 {strides = array<i32>} : memref<8x128xf32, #tpu.memory_space<vmem>>, vector<8x128xf32>,
    } else {
    }
    %c0 = arith.constant 0 : index
    %c0_1 = arith.constant 0 : index
    %3 = vector.load %arg4[%c0, %c0_1] : memref<128x384xf32, #tpu.memory_space<vmem>>, vector<128x384xf32>
    %c0_2 = arith.constant 0 : index
    %c0_3 = arith.constant 0 : index
    %4 = vector.load %arg5[%c0_2, %c0_3] : memref<1x128xf32, #tpu.memory_space<vmem>>, vector<1x128xf32>
    %5 = vector.shape_cast %4 : vector<1x128xf32> to vector<1x128xf32>
    %6 = vector.broadcast %5 : vector<1x128xf32> to vector<8x128xf32>
    %c0_4 = arith.constant 0 : index
    %c0_5 = arith.constant 0 : index
    %7 = vector.load %arg8[%c0_4, %c0_5] : memref<8x128xf32, #tpu.memory_space<vmem>>, vector<8x128xf32>
    %c0_i32_6 = arith.constant 0 : i32
    %8 = arith.index_cast %c0_i32_6 : i32 to index
    %c0_7 = arith.constant 0 : index
    %c0_8 = arith.constant 0 : index
    %9 = vector.load %arg2[%8, %c0_7, %c0_8] : memref<8x8x384xf32, #tpu.memory_space<vmem>>, vector<1x8x384xf32>
    %10 = vector.shape_cast %9 : vector<1x8x384xf32> to vector<8x384xf32>
    %cst = arith.constant dense<0.000000e+00> : vector<8x384xf32>
    %11 = tpu.matmul %7, %3, %cst {dimension_numbers = #tpu.dot_dimension_numbers<[1], [0], [0], [1], [0, 0, 1, 1], [], []>} : vector<8x128xf32>, vector<128x384xf32>, vector<8x384xf32> -> vector<8x384xf32>
    %12 = vector.extract_strided_slice %10 {offsets = [0, 0], sizes = [8, 256], strides = [1, 1]} : vector<8x384xf32> to vector<8x256xf32>
    %13 = vector.extract_strided_slice %11 {offsets = [0, 0], sizes = [8, 256], strides = [1, 1]} : vector<8x384xf32> to vector<8x256xf32>
    %14 = arith.addf %12, %13 : vector<8x256xf32>
    %15 = arith.negf %14 : vector<8x256xf32>
    %16 = math.exp %15 : vector<8x256xf32>
    %cst_9 = arith.constant 1.000000e+00 : f32
    %17 = vector.broadcast %cst_9 : f32 to vector<8x256xf32>
    %18 = arith.addf %17, %16 : vector<8x256xf32>
    %19 = arith.divf %17, %18 : vector<8x256xf32>
    %20 = vector.extract_strided_slice %19 {offsets = [0, 0], sizes = [8, 128], strides = [1, 1]} : vector<8x256xf32> to vector<8x128xf32>
    %21 = vector.extract_strided_slice %19 {offsets = [0, 128], sizes = [8, 128], strides = [1, 1]} : vector<8x256xf32> to vector<8x128xf32>
    %22 = vector.extract_strided_slice %10 {offsets = [0, 256], sizes = [8, 128], strides = [1, 1]} : vector<8x384xf32> to vector<8x128xf32>
    %23 = vector.extract_strided_slice %11 {offsets = [0, 256], sizes = [8, 128], strides = [1, 1]} : vector<8x384xf32> to vector<8x128xf32>
    %24 = arith.addf %23, %6 : vector<8x128xf32>
    %25 = arith.mulf %20, %24 : vector<8x128xf32>
    %26 = arith.addf %22, %25 : vector<8x128xf32>
    %27 = math.tanh %26 : vector<8x128xf32>
    %28 = arith.subf %7, %27 : vector<8x128xf32>
    %29 = arith.mulf %21, %28 : vector<8x128xf32>
    %30 = arith.addf %27, %29 : vector<8x128xf32>
    %31 = arith.index_cast %c0_i32_6 : i32 to index
    %c0_10 = arith.constant 0 : index
    %c0_11 = arith.constant 0 : index
    %32 = vector.load %arg6[%31, %c0_10, %c0_11] : memref<8x8x128xf32, #tpu.memory_space<vmem>>, vector<1x8x128xf32>
    %33 = vector.shape_cast %32 : vector<1x8x128xf32> to vector<8x128xf32>
    %34 = vector.shape_cast %30 : vector<8x128xf32> to vector<1x8x128xf32>
    tpu.vector_store %arg6[%31, %c0_10, %c0_11], %34 {strides = array<i32>} : memref<8x8x128xf32, #tpu.memory_space<vmem>>, vector<1x8x128xf32>,
    %c1_i32 = arith.constant 1 : i32
    %35 = arith.index_cast %c1_i32 : i32 to index
    %c0_12 = arith.constant 0 : index
    %c0_13 = arith.constant 0 : index
    %36 = vector.load %arg2[%35, %c0_12, %c0_13] : memref<8x8x384xf32, #tpu.memory_space<vmem>>, vector<1x8x384xf32>
    %37 = vector.shape_cast %36 : vector<1x8x384xf32> to vector<8x384xf32>
    %cst_14 = arith.constant dense<0.000000e+00> : vector<8x384xf32>
    %38 = tpu.matmul %30, %3, %cst_14 {dimension_numbers = #tpu.dot_dimension_numbers<[1], [0], [0], [1], [0, 0, 1, 1], [], []>} : vector<8x128xf32>, vector<128x384xf32>, vector<8x384xf32> -> vector<8x384xf32>
    %39 = vector.extract_strided_slice %37 {offsets = [0, 0], sizes = [8, 256], strides = [1, 1]} : vector<8x384xf32> to vector<8x256xf32>
    %40 = vector.extract_strided_slice %38 {offsets = [0, 0], sizes = [8, 256], strides = [1, 1]} : vector<8x384xf32> to vector<8x256xf32>
    %41 = arith.addf %39, %40 : vector<8x256xf32>
    %42 = arith.negf %41 : vector<8x256xf32>
    %43 = math.exp %42 : vector<8x256xf32>
    %cst_15 = arith.constant 1.000000e+00 : f32
    %44 = vector.broadcast %cst_15 : f32 to vector<8x256xf32>
    %45 = arith.addf %44, %43 : vector<8x256xf32>
    %46 = arith.divf %44, %45 : vector<8x256xf32>
    %47 = vector.extract_strided_slice %46 {offsets = [0, 0], sizes = [8, 128], strides = [1, 1]} : vector<8x256xf32> to vector<8x128xf32>
    %48 = vector.extract_strided_slice %46 {offsets = [0, 128], sizes = [8, 128], strides = [1, 1]} : vector<8x256xf32> to vector<8x128xf32>
    %49 = vector.extract_strided_slice %37 {offsets = [0, 256], sizes = [8, 128], strides = [1, 1]} : vector<8x384xf32> to vector<8x128xf32>
    %50 = vector.extract_strided_slice %38 {offsets = [0, 256], sizes = [8, 128], strides = [1, 1]} : vector<8x384xf32> to vector<8x128xf32>
    %51 = arith.addf %50, %6 : vector<8x128xf32>
    %52 = arith.mulf %47, %51 : vector<8x128xf32>
    %53 = arith.addf %49, %52 : vector<8x128xf32>
    %54 = math.tanh %53 : vector<8x128xf32>
    %55 = arith.subf %30, %54 : vector<8x128xf32>
    %56 = arith.mulf %48, %55 : vector<8x128xf32>
    %57 = arith.addf %54, %56 : vector<8x128xf32>
    %58 = arith.index_cast %c1_i32 : i32 to index
    %c0_16 = arith.constant 0 : index
    %c0_17 = arith.constant 0 : index
    %59 = vector.load %arg6[%58, %c0_16, %c0_17] : memref<8x8x128xf32, #tpu.memory_space<vmem>>, vector<1x8x128xf32>
    %60 = vector.shape_cast %59 : vector<1x8x128xf32> to vector<8x128xf32>
    %61 = vector.shape_cast %57 : vector<8x128xf32> to vector<1x8x128xf32>
    tpu.vector_store %arg6[%58, %c0_16, %c0_17], %61 {strides = array<i32>} : memref<8x8x128xf32, #tpu.memory_space<vmem>>, vector<1x8x128xf32>,
    %c2_i32 = arith.constant 2 : i32
    %62 = arith.index_cast %c2_i32 : i32 to index
    %c0_18 = arith.constant 0 : index
    %c0_19 = arith.constant 0 : index
    %63 = vector.load %arg2[%62, %c0_18, %c0_19] : memref<8x8x384xf32, #tpu.memory_space<vmem>>, vector<1x8x384xf32>
    %64 = vector.shape_cast %63 : vector<1x8x384xf32> to vector<8x384xf32>
    %cst_20 = arith.constant dense<0.000000e+00> : vector<8x384xf32>
    %65 = tpu.matmul %57, %3, %cst_20 {dimension_numbers = #tpu.dot_dimension_numbers<[1], [0], [0], [1], [0, 0, 1, 1], [], []>} : vector<8x128xf32>, vector<128x384xf32>, vector<8x384xf32> -> vector<8x384xf32>
    %66 = vector.extract_strided_slice %64 {offsets = [0, 0], sizes = [8, 256], strides = [1, 1]} : vector<8x384xf32> to vector<8x256xf32>
    %67 = vector.extract_strided_slice %65 {offsets = [0, 0], sizes = [8, 256], strides = [1, 1]} : vector<8x384xf32> to vector<8x256xf32>
    %68 = arith.addf %66, %67 : vector<8x256xf32>
    %69 = arith.negf %68 : vector<8x256xf32>
    %70 = math.exp %69 : vector<8x256xf32>
    %cst_21 = arith.constant 1.000000e+00 : f32
    %71 = vector.broadcast %cst_21 : f32 to vector<8x256xf32>
    %72 = arith.addf %71, %70 : vector<8x256xf32>
    %73 = arith.divf %71, %72 : vector<8x256xf32>
    %74 = vector.extract_strided_slice %73 {offsets = [0, 0], sizes = [8, 128], strides = [1, 1]} : vector<8x256xf32> to vector<8x128xf32>
    %75 = vector.extract_strided_slice %73 {offsets = [0, 128], sizes = [8, 128], strides = [1, 1]} : vector<8x256xf32> to vector<8x128xf32>
    %76 = vector.extract_strided_slice %64 {offsets = [0, 256], sizes = [8, 128], strides = [1, 1]} : vector<8x384xf32> to vector<8x128xf32>
    %77 = vector.extract_strided_slice %65 {offsets = [0, 256], sizes = [8, 128], strides = [1, 1]} : vector<8x384xf32> to vector<8x128xf32>
    %78 = arith.addf %77, %6 : vector<8x128xf32>
    %79 = arith.mulf %74, %78 : vector<8x128xf32>
    %80 = arith.addf %76, %79 : vector<8x128xf32>
    %81 = math.tanh %80 : vector<8x128xf32>
    %82 = arith.subf %57, %81 : vector<8x128xf32>
    %83 = arith.mulf %75, %82 : vector<8x128xf32>
    %84 = arith.addf %81, %83 : vector<8x128xf32>
    %85 = arith.index_cast %c2_i32 : i32 to index
    %c0_22 = arith.constant 0 : index
    %c0_23 = arith.constant 0 : index
    %86 = vector.load %arg6[%85, %c0_22, %c0_23] : memref<8x8x128xf32, #tpu.memory_space<vmem>>, vector<1x8x128xf32>
    %87 = vector.shape_cast %86 : vector<1x8x128xf32> to vector<8x128xf32>
    %88 = vector.shape_cast %84 : vector<8x128xf32> to vector<1x8x128xf32>
    tpu.vector_store %arg6[%85, %c0_22, %c0_23], %88 {strides = array<i32>} : memref<8x8x128xf32, #tpu.memory_space<vmem>>, vector<1x8x128xf32>,
    %c3_i32 = arith.constant 3 : i32
    %89 = arith.index_cast %c3_i32 : i32 to index
    %c0_24 = arith.constant 0 : index
    %c0_25 = arith.constant 0 : index
    %90 = vector.load %arg2[%89, %c0_24, %c0_25] : memref<8x8x384xf32, #tpu.memory_space<vmem>>, vector<1x8x384xf32>
    %91 = vector.shape_cast %90 : vector<1x8x384xf32> to vector<8x384xf32>
    %cst_26 = arith.constant dense<0.000000e+00> : vector<8x384xf32>
    %92 = tpu.matmul %84, %3, %cst_26 {dimension_numbers = #tpu.dot_dimension_numbers<[1], [0], [0], [1], [0, 0, 1, 1], [], []>} : vector<8x128xf32>, vector<128x384xf32>, vector<8x384xf32> -> vector<8x384xf32>
    %93 = vector.extract_strided_slice %91 {offsets = [0, 0], sizes = [8, 256], strides = [1, 1]} : vector<8x384xf32> to vector<8x256xf32>
    %94 = vector.extract_strided_slice %92 {offsets = [0, 0], sizes = [8, 256], strides = [1, 1]} : vector<8x384xf32> to vector<8x256xf32>
    %95 = arith.addf %93, %94 : vector<8x256xf32>
    %96 = arith.negf %95 : vector<8x256xf32>
    %97 = math.exp %96 : vector<8x256xf32>
    %cst_27 = arith.constant 1.000000e+00 : f32
    %98 = vector.broadcast %cst_27 : f32 to vector<8x256xf32>
    %99 = arith.addf %98, %97 : vector<8x256xf32>
    %100 = arith.divf %98, %99 : vector<8x256xf32>
    %101 = vector.extract_strided_slice %100 {offsets = [0, 0], sizes = [8, 128], strides = [1, 1]} : vector<8x256xf32> to vector<8x128xf32>
    %102 = vector.extract_strided_slice %100 {offsets = [0, 128], sizes = [8, 128], strides = [1, 1]} : vector<8x256xf32> to vector<8x128xf32>
    %103 = vector.extract_strided_slice %91 {offsets = [0, 256], sizes = [8, 128], strides = [1, 1]} : vector<8x384xf32> to vector<8x128xf32>
    %104 = vector.extract_strided_slice %92 {offsets = [0, 256], sizes = [8, 128], strides = [1, 1]} : vector<8x384xf32> to vector<8x128xf32>
    %105 = arith.addf %104, %6 : vector<8x128xf32>
    %106 = arith.mulf %101, %105 : vector<8x128xf32>
    %107 = arith.addf %103, %106 : vector<8x128xf32>
    %108 = math.tanh %107 : vector<8x128xf32>
    %109 = arith.subf %84, %108 : vector<8x128xf32>
    %110 = arith.mulf %102, %109 : vector<8x128xf32>
    %111 = arith.addf %108, %110 : vector<8x128xf32>
    %112 = arith.index_cast %c3_i32 : i32 to index
    %c0_28 = arith.constant 0 : index
    %c0_29 = arith.constant 0 : index
    %113 = vector.load %arg6[%112, %c0_28, %c0_29] : memref<8x8x128xf32, #tpu.memory_space<vmem>>, vector<1x8x128xf32>
    %114 = vector.shape_cast %113 : vector<1x8x128xf32> to vector<8x128xf32>
    %115 = vector.shape_cast %111 : vector<8x128xf32> to vector<1x8x128xf32>
    tpu.vector_store %arg6[%112, %c0_28, %c0_29], %115 {strides = array<i32>} : memref<8x8x128xf32, #tpu.memory_space<vmem>>, vector<1x8x128xf32>,
    %c4_i32 = arith.constant 4 : i32
    %116 = arith.index_cast %c4_i32 : i32 to index
    %c0_30 = arith.constant 0 : index
    %c0_31 = arith.constant 0 : index
    %117 = vector.load %arg2[%116, %c0_30, %c0_31] : memref<8x8x384xf32, #tpu.memory_space<vmem>>, vector<1x8x384xf32>
    %118 = vector.shape_cast %117 : vector<1x8x384xf32> to vector<8x384xf32>
    %cst_32 = arith.constant dense<0.000000e+00> : vector<8x384xf32>
    %119 = tpu.matmul %111, %3, %cst_32 {dimension_numbers = #tpu.dot_dimension_numbers<[1], [0], [0], [1], [0, 0, 1, 1], [], []>} : vector<8x128xf32>, vector<128x384xf32>, vector<8x384xf32> -> vector<8x384xf32>
    %120 = vector.extract_strided_slice %118 {offsets = [0, 0], sizes = [8, 256], strides = [1, 1]} : vector<8x384xf32> to vector<8x256xf32>
    %121 = vector.extract_strided_slice %119 {offsets = [0, 0], sizes = [8, 256], strides = [1, 1]} : vector<8x384xf32> to vector<8x256xf32>
    %122 = arith.addf %120, %121 : vector<8x256xf32>
    %123 = arith.negf %122 : vector<8x256xf32>
    %124 = math.exp %123 : vector<8x256xf32>
    %cst_33 = arith.constant 1.000000e+00 : f32
    %125 = vector.broadcast %cst_33 : f32 to vector<8x256xf32>
    %126 = arith.addf %125, %124 : vector<8x256xf32>
    %127 = arith.divf %125, %126 : vector<8x256xf32>
    %128 = vector.extract_strided_slice %127 {offsets = [0, 0], sizes = [8, 128], strides = [1, 1]} : vector<8x256xf32> to vector<8x128xf32>
    %129 = vector.extract_strided_slice %127 {offsets = [0, 128], sizes = [8, 128], strides = [1, 1]} : vector<8x256xf32> to vector<8x128xf32>
    %130 = vector.extract_strided_slice %118 {offsets = [0, 256], sizes = [8, 128], strides = [1, 1]} : vector<8x384xf32> to vector<8x128xf32>
    %131 = vector.extract_strided_slice %119 {offsets = [0, 256], sizes = [8, 128], strides = [1, 1]} : vector<8x384xf32> to vector<8x128xf32>
    %132 = arith.addf %131, %6 : vector<8x128xf32>
    %133 = arith.mulf %128, %132 : vector<8x128xf32>
    %134 = arith.addf %130, %133 : vector<8x128xf32>
    %135 = math.tanh %134 : vector<8x128xf32>
    %136 = arith.subf %111, %135 : vector<8x128xf32>
    %137 = arith.mulf %129, %136 : vector<8x128xf32>
    %138 = arith.addf %135, %137 : vector<8x128xf32>
    %139 = arith.index_cast %c4_i32 : i32 to index
    %c0_34 = arith.constant 0 : index
    %c0_35 = arith.constant 0 : index
    %140 = vector.load %arg6[%139, %c0_34, %c0_35] : memref<8x8x128xf32, #tpu.memory_space<vmem>>, vector<1x8x128xf32>
    %141 = vector.shape_cast %140 : vector<1x8x128xf32> to vector<8x128xf32>
    %142 = vector.shape_cast %138 : vector<8x128xf32> to vector<1x8x128xf32>
    tpu.vector_store %arg6[%139, %c0_34, %c0_35], %142 {strides = array<i32>} : memref<8x8x128xf32, #tpu.memory_space<vmem>>, vector<1x8x128xf32>,
    %c5_i32 = arith.constant 5 : i32
    %143 = arith.index_cast %c5_i32 : i32 to index
    %c0_36 = arith.constant 0 : index
    %c0_37 = arith.constant 0 : index
    %144 = vector.load %arg2[%143, %c0_36, %c0_37] : memref<8x8x384xf32, #tpu.memory_space<vmem>>, vector<1x8x384xf32>
    %145 = vector.shape_cast %144 : vector<1x8x384xf32> to vector<8x384xf32>
    %cst_38 = arith.constant dense<0.000000e+00> : vector<8x384xf32>
    %146 = tpu.matmul %138, %3, %cst_38 {dimension_numbers = #tpu.dot_dimension_numbers<[1], [0], [0], [1], [0, 0, 1, 1], [], []>} : vector<8x128xf32>, vector<128x384xf32>, vector<8x384xf32> -> vector<8x384xf32>
    %147 = vector.extract_strided_slice %145 {offsets = [0, 0], sizes = [8, 256], strides = [1, 1]} : vector<8x384xf32> to vector<8x256xf32>
    %148 = vector.extract_strided_slice %146 {offsets = [0, 0], sizes = [8, 256], strides = [1, 1]} : vector<8x384xf32> to vector<8x256xf32>
    %149 = arith.addf %147, %148 : vector<8x256xf32>
    %150 = arith.negf %149 : vector<8x256xf32>
    %151 = math.exp %150 : vector<8x256xf32>
    %cst_39 = arith.constant 1.000000e+00 : f32
    %152 = vector.broadcast %cst_39 : f32 to vector<8x256xf32>
    %153 = arith.addf %152, %151 : vector<8x256xf32>
    %154 = arith.divf %152, %153 : vector<8x256xf32>
    %155 = vector.extract_strided_slice %154 {offsets = [0, 0], sizes = [8, 128], strides = [1, 1]} : vector<8x256xf32> to vector<8x128xf32>
    %156 = vector.extract_strided_slice %154 {offsets = [0, 128], sizes = [8, 128], strides = [1, 1]} : vector<8x256xf32> to vector<8x128xf32>
    %157 = vector.extract_strided_slice %145 {offsets = [0, 256], sizes = [8, 128], strides = [1, 1]} : vector<8x384xf32> to vector<8x128xf32>
    %158 = vector.extract_strided_slice %146 {offsets = [0, 256], sizes = [8, 128], strides = [1, 1]} : vector<8x384xf32> to vector<8x128xf32>
    %159 = arith.addf %158, %6 : vector<8x128xf32>
    %160 = arith.mulf %155, %159 : vector<8x128xf32>
    %161 = arith.addf %157, %160 : vector<8x128xf32>
    %162 = math.tanh %161 : vector<8x128xf32>
    %163 = arith.subf %138, %162 : vector<8x128xf32>
    %164 = arith.mulf %156, %163 : vector<8x128xf32>
    %165 = arith.addf %162, %164 : vector<8x128xf32>
    %166 = arith.index_cast %c5_i32 : i32 to index
    %c0_40 = arith.constant 0 : index
    %c0_41 = arith.constant 0 : index
    %167 = vector.load %arg6[%166, %c0_40, %c0_41] : memref<8x8x128xf32, #tpu.memory_space<vmem>>, vector<1x8x128xf32>
    %168 = vector.shape_cast %167 : vector<1x8x128xf32> to vector<8x128xf32>
    %169 = vector.shape_cast %165 : vector<8x128xf32> to vector<1x8x128xf32>
    tpu.vector_store %arg6[%166, %c0_40, %c0_41], %169 {strides = array<i32>} : memref<8x8x128xf32, #tpu.memory_space<vmem>>, vector<1x8x128xf32>,
    %c6_i32 = arith.constant 6 : i32
    %170 = arith.index_cast %c6_i32 : i32 to index
    %c0_42 = arith.constant 0 : index
    %c0_43 = arith.constant 0 : index
    %171 = vector.load %arg2[%170, %c0_42, %c0_43] : memref<8x8x384xf32, #tpu.memory_space<vmem>>, vector<1x8x384xf32>
    %172 = vector.shape_cast %171 : vector<1x8x384xf32> to vector<8x384xf32>
    %cst_44 = arith.constant dense<0.000000e+00> : vector<8x384xf32>
    %173 = tpu.matmul %165, %3, %cst_44 {dimension_numbers = #tpu.dot_dimension_numbers<[1], [0], [0], [1], [0, 0, 1, 1], [], []>} : vector<8x128xf32>, vector<128x384xf32>, vector<8x384xf32> -> vector<8x384xf32>
    %174 = vector.extract_strided_slice %172 {offsets = [0, 0], sizes = [8, 256], strides = [1, 1]} : vector<8x384xf32> to vector<8x256xf32>
    %175 = vector.extract_strided_slice %173 {offsets = [0, 0], sizes = [8, 256], strides = [1, 1]} : vector<8x384xf32> to vector<8x256xf32>
    %176 = arith.addf %174, %175 : vector<8x256xf32>
    %177 = arith.negf %176 : vector<8x256xf32>
    %178 = math.exp %177 : vector<8x256xf32>
    %cst_45 = arith.constant 1.000000e+00 : f32
    %179 = vector.broadcast %cst_45 : f32 to vector<8x256xf32>
    %180 = arith.addf %179, %178 : vector<8x256xf32>
    %181 = arith.divf %179, %180 : vector<8x256xf32>
    %182 = vector.extract_strided_slice %181 {offsets = [0, 0], sizes = [8, 128], strides = [1, 1]} : vector<8x256xf32> to vector<8x128xf32>
    %183 = vector.extract_strided_slice %181 {offsets = [0, 128], sizes = [8, 128], strides = [1, 1]} : vector<8x256xf32> to vector<8x128xf32>
    %184 = vector.extract_strided_slice %172 {offsets = [0, 256], sizes = [8, 128], strides = [1, 1]} : vector<8x384xf32> to vector<8x128xf32>
    %185 = vector.extract_strided_slice %173 {offsets = [0, 256], sizes = [8, 128], strides = [1, 1]} : vector<8x384xf32> to vector<8x128xf32>
    %186 = arith.addf %185, %6 : vector<8x128xf32>
    %187 = arith.mulf %182, %186 : vector<8x128xf32>
    %188 = arith.addf %184, %187 : vector<8x128xf32>
    %189 = math.tanh %188 : vector<8x128xf32>
    %190 = arith.subf %165, %189 : vector<8x128xf32>
    %191 = arith.mulf %183, %190 : vector<8x128xf32>
    %192 = arith.addf %189, %191 : vector<8x128xf32>
    %193 = arith.index_cast %c6_i32 : i32 to index
    %c0_46 = arith.constant 0 : index
    %c0_47 = arith.constant 0 : index
    %194 = vector.load %arg6[%193, %c0_46, %c0_47] : memref<8x8x128xf32, #tpu.memory_space<vmem>>, vector<1x8x128xf32>
    %195 = vector.shape_cast %194 : vector<1x8x128xf32> to vector<8x128xf32>
    %196 = vector.shape_cast %192 : vector<8x128xf32> to vector<1x8x128xf32>
    tpu.vector_store %arg6[%193, %c0_46, %c0_47], %196 {strides = array<i32>} : memref<8x8x128xf32, #tpu.memory_space<vmem>>, vector<1x8x128xf32>,
    %c7_i32 = arith.constant 7 : i32
    %197 = arith.index_cast %c7_i32 : i32 to index
    %c0_48 = arith.constant 0 : index
    %c0_49 = arith.constant 0 : index
    %198 = vector.load %arg2[%197, %c0_48, %c0_49] : memref<8x8x384xf32, #tpu.memory_space<vmem>>, vector<1x8x384xf32>
    %199 = vector.shape_cast %198 : vector<1x8x384xf32> to vector<8x384xf32>
    %cst_50 = arith.constant dense<0.000000e+00> : vector<8x384xf32>
    %200 = tpu.matmul %192, %3, %cst_50 {dimension_numbers = #tpu.dot_dimension_numbers<[1], [0], [0], [1], [0, 0, 1, 1], [], []>} : vector<8x128xf32>, vector<128x384xf32>, vector<8x384xf32> -> vector<8x384xf32>
    %201 = vector.extract_strided_slice %199 {offsets = [0, 0], sizes = [8, 256], strides = [1, 1]} : vector<8x384xf32> to vector<8x256xf32>
    %202 = vector.extract_strided_slice %200 {offsets = [0, 0], sizes = [8, 256], strides = [1, 1]} : vector<8x384xf32> to vector<8x256xf32>
    %203 = arith.addf %201, %202 : vector<8x256xf32>
    %204 = arith.negf %203 : vector<8x256xf32>
    %205 = math.exp %204 : vector<8x256xf32>
    %cst_51 = arith.constant 1.000000e+00 : f32
    %206 = vector.broadcast %cst_51 : f32 to vector<8x256xf32>
    %207 = arith.addf %206, %205 : vector<8x256xf32>
    %208 = arith.divf %206, %207 : vector<8x256xf32>
    %209 = vector.extract_strided_slice %208 {offsets = [0, 0], sizes = [8, 128], strides = [1, 1]} : vector<8x256xf32> to vector<8x128xf32>
    %210 = vector.extract_strided_slice %208 {offsets = [0, 128], sizes = [8, 128], strides = [1, 1]} : vector<8x256xf32> to vector<8x128xf32>
    %211 = vector.extract_strided_slice %199 {offsets = [0, 256], sizes = [8, 128], strides = [1, 1]} : vector<8x384xf32> to vector<8x128xf32>
    %212 = vector.extract_strided_slice %200 {offsets = [0, 256], sizes = [8, 128], strides = [1, 1]} : vector<8x384xf32> to vector<8x128xf32>
    %213 = arith.addf %212, %6 : vector<8x128xf32>
    %214 = arith.mulf %209, %213 : vector<8x128xf32>
    %215 = arith.addf %211, %214 : vector<8x128xf32>
    %216 = math.tanh %215 : vector<8x128xf32>
    %217 = arith.subf %192, %216 : vector<8x128xf32>
    %218 = arith.mulf %210, %217 : vector<8x128xf32>
    %219 = arith.addf %216, %218 : vector<8x128xf32>
    %220 = arith.index_cast %c7_i32 : i32 to index
    %c0_52 = arith.constant 0 : index
    %c0_53 = arith.constant 0 : index
    %221 = vector.load %arg6[%220, %c0_52, %c0_53] : memref<8x8x128xf32, #tpu.memory_space<vmem>>, vector<1x8x128xf32>
    %222 = vector.shape_cast %221 : vector<1x8x128xf32> to vector<8x128xf32>
    %223 = vector.shape_cast %219 : vector<8x128xf32> to vector<1x8x128xf32>
    tpu.vector_store %arg6[%220, %c0_52, %c0_53], %223 {strides = array<i32>} : memref<8x8x128xf32, #tpu.memory_space<vmem>>, vector<1x8x128xf32>,
    %c8_i32 = arith.constant 8 : i32
    %c0_54 = arith.constant 0 : index
    %c0_55 = arith.constant 0 : index
    %224 = vector.load %arg8[%c0_54, %c0_55] : memref<8x128xf32, #tpu.memory_space<vmem>>, vector<8x128xf32>
    tpu.vector_store %arg8[%c0_54, %c0_55], %219 {strides = array<i32>} : memref<8x128xf32, #tpu.memory_space<vmem>>, vector<8x128xf32>,
    %c0_i32_56 = arith.constant 0 : i32
    %225 = arith.cmpi eq, %arg1, %c0_i32_56 : i32
    %226 = arith.extui %225 : i1 to i32
    %c0_i32_57 = arith.constant 0 : i32
    %227 = arith.cmpi ne, %226, %c0_i32_57 : i32
    scf.if %227 {
      %c0_58 = arith.constant 0 : index
      %c0_59 = arith.constant 0 : index
      %228 = vector.load %arg7[%c0_58, %c0_59] : memref<8x128xf32, #tpu.memory_space<vmem>>, vector<8x128xf32>
      tpu.vector_store %arg7[%c0_58, %c0_59], %219 {strides = array<i32>} : memref<8x128xf32, #tpu.memory_space<vmem>>, vector<8x128xf32>,
    } else {
    }
    return
  }
  func.func @transform_0(%arg0: i32, %arg1: i32) -> (i32, i32, i32) {
    %c0_i32 = arith.constant 0 : i32
    %c0_i32_0 = arith.constant 0 : i32
    return %arg1, %arg0, %c0_i32 : i32, i32, i32
  }
  func.func @transform_1(%arg0: i32, %arg1: i32) -> (i32, i32) {
    %c0_i32 = arith.constant 0 : i32
    %c0_i32_0 = arith.constant 0 : i32
    return %arg0, %c0_i32 : i32, i32
  }
  func.func @transform_2(%arg0: i32, %arg1: i32) -> (i32, i32) {
    %c0_i32 = arith.constant 0 : i32
    %c0_i32_0 = arith.constant 0 : i32
    %c0_i32_1 = arith.constant 0 : i32
    return %c0_i32, %c0_i32_0 : i32, i32
  }
  func.func @transform_3(%arg0: i32, %arg1: i32) -> (i32, i32) {
    %c0_i32 = arith.constant 0 : i32
    %c0_i32_0 = arith.constant 0 : i32
    %c0_i32_1 = arith.constant 0 : i32
    return %c0_i32, %c0_i32_0 : i32, i32
  }
  func.func @transform_4(%arg0: i32, %arg1: i32) -> (i32, i32, i32) {
    %c0_i32 = arith.constant 0 : i32
    %c0_i32_0 = arith.constant 0 : i32
    return %arg1, %arg0, %c0_i32 : i32, i32, i32
  }
  func.func @transform_5(%arg0: i32, %arg1: i32) -> (i32, i32) {
    %c0_i32 = arith.constant 0 : i32
    %c0_i32_0 = arith.constant 0 : i32
    return %arg0, %c0_i32 : i32, i32
  }
}

</mosaic_0001>

<llo_original>
// kernel: decoder_rnn_forward.1
$region0: #{decoder_rnn_forward.1}
  #allocation0 [shape = 'u32[]', space=smem, size = 0x4, offset = 0x4, fixed_abs, tag = 'smem constant byte address 0x4 - core index']
  #allocation1 [shape = 'u32[72,128]{1,0:T(1,128)}', space=vmem, size = 0x9000, scoped, tag = 'internal scratch']
  #allocation2 [shape = 'f32[8,128]{1,0:T(8,128)}', space=vmem, size = 0x1000, scoped, tag = 'scratch operand']
  %s0 = inlined_call_operand.vmem [shape: f32[8,8,384], index: 0, kind: input, shape index: {}]
  %s1 = inlined_call_operand.vmem [shape: f32[8,128], index: 1, kind: input, shape index: {}]
  %s2 = inlined_call_operand.vmem [shape: f32[128,384], index: 2, kind: input, shape index: {}]
  %s3 = inlined_call_operand.vmem [shape: f32[1,128], index: 3, kind: input, shape index: {}]
  %s4 = inlined_call_operand.vmem [shape: f32[8,8,128], index: 4, kind: output, shape index: {0}]
  %s5 = inlined_call_operand.vmem [shape: f32[8,128], index: 5, kind: output, shape index: {1}]
  %6 = xla_tuple %s4, %s5
  %s7 = sld [smem:[#allocation0]]
  $region42: #{decoder_rnn_forward.1} parent=0
    _
  %s9 = ssub.s32 1, %s7
  %s10 = scalar_select 0, %s9, %s7
  // Predicated region
  $region2: #{decoder_rnn_forward.1} parent=0 // pred_check
    _
  $region3: #{decoder_rnn_forward.1} parent=0 // pred_check_branch
    %12 = sbr.rel (0) target = $region5
  $region4: #{decoder_rnn_forward.1} parent=0 // pred_region
    _
  $region5: #{decoder_rnn_forward.1} parent=0 // pred_fallthru
    _
  // Predicated region
  $region6: #{decoder_rnn_forward.1} parent=0 // pred_check
    _
  $region7: #{decoder_rnn_forward.1} parent=0 // pred_check_branch
    %14 = sbr.rel (0) target = $region9
  $region8: #{decoder_rnn_forward.1} parent=0 // pred_region
    _
  $region9: #{decoder_rnn_forward.1} parent=0 // pred_fallthru
    _
  // Predicated region
  $region10: #{decoder_rnn_forward.1} parent=0 // pred_check
    _
  $region11: #{decoder_rnn_forward.1} parent=0 // pred_check_branch
    %16 = sbr.rel (0) target = $region13
  $region12: #{decoder_rnn_forward.1} parent=0 // pred_region
    _
  $region13: #{decoder_rnn_forward.1} parent=0 // pred_fallthru
    _
  // Predicated region
  $region14: #{decoder_rnn_forward.1} parent=0 // pred_check
    _
  $region15: #{decoder_rnn_forward.1} parent=0 // pred_check_branch
    %18 = sbr.rel (0) target = $region17
  $region16: #{decoder_rnn_forward.1} parent=0 // pred_region
    _
  $region17: #{decoder_rnn_forward.1} parent=0 // pred_fallthru
    _
  %p19 = scmp.eq.s32.totalorder 0, 0
  // Predicated region
  $region18: #{decoder_rnn_forward.1} parent=0 // pred_check
    %p20 = pneg %p19
  $region19: #{decoder_rnn_forward.1} parent=0 // pred_check_branch
    %22 = sbr.rel (%p20) target = $region21
  $region20: #{decoder_rnn_forward.1} parent=0 // pred_region
    %v23 = vld [vmem:[%s1] sm:$0xff]
    %24 = vst [vmem:[#allocation2] sm:$0xff] %v23
  $region21: #{decoder_rnn_forward.1} parent=0 // pred_fallthru
    _
  %v25 = vld [vmem:[%s2] sm:$0xff]
  %v26 = vld [vmem:[%s2 + $0x8] sm:$0xff]
  %v27 = vld [vmem:[%s2 + $0x10] sm:$0xff]
  %v28 = vld [vmem:[%s2 + $0x18] sm:$0xff]
  %v29 = vld [vmem:[%s2 + $0x20] sm:$0xff]
  %v30 = vld [vmem:[%s2 + $0x28] sm:$0xff]
  %v31 = vld [vmem:[%s2 + $0x30] sm:$0xff]
  %v32 = vld [vmem:[%s2 + $0x38] sm:$0xff]
  %v33 = vld [vmem:[%s2 + $0x40] sm:$0xff]
  %v34 = vld [vmem:[%s2 + $0x48] sm:$0xff]
  %v35 = vld [vmem:[%s2 + $0x50] sm:$0xff]
  %v36 = vld [vmem:[%s2 + $0x58] sm:$0xff]
  %v37 = vld [vmem:[%s2 + $0x60] sm:$0xff]
  %v38 = vld [vmem:[%s2 + $0x68] sm:$0xff]
  %v39 = vld [vmem:[%s2 + $0x70] sm:$0xff]
  %v40 = vld [vmem:[%s2 + $0x78] sm:$0xff]
  %v41 = vld [vmem:[%s2 + $0x80] sm:$0xff]
  %v42 = vld [vmem:[%s2 + $0x88] sm:$0xff]
  %v43 = vld [vmem:[%s2 + $0x90] sm:$0xff]
  %v44 = vld [vmem:[%s2 + $0x98] sm:$0xff]
  %v45 = vld [vmem:[%s2 + $0xa0] sm:$0xff]
  %v46 = vld [vmem:[%s2 + $0xa8] sm:$0xff]
  %v47 = vld [vmem:[%s2 + $0xb0] sm:$0xff]
  %v48 = vld [vmem:[%s2 + $0xb8] sm:$0xff]
  %v49 = vld [vmem:[%s2 + $0xc0] sm:$0xff]
  %v50 = vld [vmem:[%s2 + $0xc8] sm:$0xff]
  %v51 = vld [vmem:[%s2 + $0xd0] sm:$0xff]
  %v52 = vld [vmem:[%s2 + $0xd8] sm:$0xff]
  %v53 = vld [vmem:[%s2 + $0xe0] sm:$0xff]
  %v54 = vld [vmem:[%s2 + $0xe8] sm:$0xff]
  %v55 = vld [vmem:[%s2 + $0xf0] sm:$0xff]
  %v56 = vld [vmem:[%s2 + $0xf8] sm:$0xff]
  %v57 = vld [vmem:[%s2 + $0x100] sm:$0xff]
  %v58 = vld [vmem:[%s2 + $0x108] sm:$0xff]
  %v59 = vld [vmem:[%s2 + $0x110] sm:$0xff]
  %v60 = vld [vmem:[%s2 + $0x118] sm:$0xff]
  %v61 = vld [vmem:[%s2 + $0x120] sm:$0xff]
  %v62 = vld [vmem:[%s2 + $0x128] sm:$0xff]
  %v63 = vld [vmem:[%s2 + $0x130] sm:$0xff]
  %v64 = vld [vmem:[%s2 + $0x138] sm:$0xff]
  %v65 = vld [vmem:[%s2 + $0x140] sm:$0xff]
  %v66 = vld [vmem:[%s2 + $0x148] sm:$0xff]
  %v67 = vld [vmem:[%s2 + $0x150] sm:$0xff]
  %v68 = vld [vmem:[%s2 + $0x158] sm:$0xff]
  %v69 = vld [vmem:[%s2 + $0x160] sm:$0xff]
  %v70 = vld [vmem:[%s2 + $0x168] sm:$0xff]
  %v71 = vld [vmem:[%s2 + $0x170] sm:$0xff]
  %v72 = vld [vmem:[%s2 + $0x178] sm:$0xff]
  %v73 = vld [vmem:[%s3] sm:$0x1]
  %v75 = vperm.slane %v73, 0
  %v77 = vld [vmem:[#allocation2] sm:$0xff]
  %v78 = vld [vmem:[%s0] sm:$0xff]
  %v79 = vld [vmem:[%s0 + $0x8] sm:$0xff]
  %v80 = vld [vmem:[%s0 + $0x10] sm:$0xff]
  %81 = vmatpush.msra.mxu0 %v70
  %82 = vmatpush.msra.mxu0 %v67
  %83 = vmatpush.msra.mxu0 %v64
  %84 = vmatpush.msra.mxu0 %v61
  %85 = vmatpush.msra.mxu0 %v58
  %86 = vmatpush.msra.mxu0 %v55
  %87 = vmatpush.msra.mxu0 %v52
  %88 = vmatpush.msra.mxu0 %v49
  %89 = vmatpush.msra.mxu0 %v46
  %90 = vmatpush.msra.mxu0 %v43
  %91 = vmatpush.msra.mxu0 %v40
  %92 = vmatpush.msra.mxu0 %v37
  %93 = vmatpush.msra.mxu0 %v34
  %94 = vmatpush.msra.mxu0 %v31
  %95 = vmatpush.msra.mxu0 %v28
  %96 = vmatpush.msra.mxu0 %v25
  %97 = vmatmul.f32.gmra.mxu0 %v77
  %v98 = vpop.f32.mrf.mxu0
  %v99 = vadd.f32 0.0, %v98
  %100 = vdwg.mxu0
  %101 = vmatpush.msra.mxu0 %v71
  %102 = vmatpush.msra.mxu0 %v68
  %103 = vmatpush.msra.mxu0 %v65
  %104 = vmatpush.msra.mxu0 %v62
  %105 = vmatpush.msra.mxu0 %v59
  %106 = vmatpush.msra.mxu0 %v56
  %107 = vmatpush.msra.mxu0 %v53
  %108 = vmatpush.msra.mxu0 %v50
  %109 = vmatpush.msra.mxu0 %v47
  %110 = vmatpush.msra.mxu0 %v44
  %111 = vmatpush.msra.mxu0 %v41
  %112 = vmatpush.msra.mxu0 %v38
  %113 = vmatpush.msra.mxu0 %v35
  %114 = vmatpush.msra.mxu0 %v32
  %115 = vmatpush.msra.mxu0 %v29
  %116 = vmatpush.msra.mxu0 %v26
  %117 = vmatmul.f32.gmra.mxu0 %v77
  %v118 = vpop.f32.mrf.mxu0
  %v119 = vadd.f32 0.0, %v118
  %120 = vdwg.mxu0
  %121 = vmatpush.msra.mxu0 %v72
  %122 = vmatpush.msra.mxu0 %v69
  %123 = vmatpush.msra.mxu0 %v66
  %124 = vmatpush.msra.mxu0 %v63
  %125 = vmatpush.msra.mxu0 %v60
  %126 = vmatpush.msra.mxu0 %v57
  %127 = vmatpush.msra.mxu0 %v54
  %128 = vmatpush.msra.mxu0 %v51
  %129 = vmatpush.msra.mxu0 %v48
  %130 = vmatpush.msra.mxu0 %v45
  %131 = vmatpush.msra.mxu0 %v42
  %132 = vmatpush.msra.mxu0 %v39
  %133 = vmatpush.msra.mxu0 %v36
  %134 = vmatpush.msra.mxu0 %v33
  %135 = vmatpush.msra.mxu0 %v30
  %136 = vmatpush.msra.mxu0 %v27
  %137 = vmatmul.f32.gmra.mxu0 %v77
  %v138 = vpop.f32.mrf.mxu0
  %v139 = vadd.f32 0.0, %v138
  %140 = vdwg.mxu0
  %v141 = vadd.f32 %v78, %v99
  %v142 = vadd.f32 %v79, %v119
  %v143 = vxor.u32 %v141, 2147483648
  %v144 = vxor.u32 %v142, 2147483648
  %v145 = vmul.f32 %v143, 1.442695
  %v146 = vpow.pop %v145
  %v147 = vmul.f32 %v144, 1.442695
  %v148 = vpow.pop %v147
  %v149 = vadd.f32 %v146, 1.0
  %v150 = vadd.f32 %v148, 1.0
  %v151 = vrcp.pop %v149
  %v152 = vmul.f32 %v149, %v151
  %v153 = vsub.f32 1.0, %v152
  %v154 = vmul.f32 %v151, %v153
  %v155 = vadd.f32 %v151, %v154
  %vm156 = vweird.f32 %v149
  %vm157 = vweird.f32 %v151
  %vm158 = vmor %vm156, %vm157
  %v159 = vsel %vm158, %v151, %v155
  %v160 = vand.u32 2147483647, %v149
  %vm161 = vcmp.eq.f32.partialorder %v160, 8.507059e+37
  %v162 = vand.u32 %v149, 2147483648
  %v163 = vor.u32 1.1754944e-38, %v162
  %v164 = vsel %vm161, %v163, %v159
  %v165 = vmul.f32 1.0, %v164
  %v166 = vrcp.pop %v150
  %v167 = vmul.f32 %v150, %v166
  %v168 = vsub.f32 1.0, %v167
  %v169 = vmul.f32 %v166, %v168
  %v170 = vadd.f32 %v166, %v169
  %vm171 = vweird.f32 %v150
  %vm172 = vweird.f32 %v166
  %vm173 = vmor %vm171, %vm172
  %v174 = vsel %vm173, %v166, %v170
  %v175 = vand.u32 2147483647, %v150
  %vm176 = vcmp.eq.f32.partialorder %v175, 8.507059e+37
  %v177 = vand.u32 %v150, 2147483648
  %v178 = vor.u32 1.1754944e-38, %v177
  %v179 = vsel %vm176, %v178, %v174
  %v180 = vmul.f32 1.0, %v179
  %v181 = vadd.f32 %v139, %v75
  %v182 = vmul.f32 %v165, %v181
  %v183 = vadd.f32 %v80, %v182
  %v184 = vtanh.pop %v183
  %v185 = vsub.f32 %v77, %v184
  %v186 = vmul.f32 %v180, %v185
  %v187 = vadd.f32 %v184, %v186
  %188 = vst [vmem:[%s4] sm:$0xff] %v187
  %s189 = scalar_lea.vmem %s0, 24
  %v190 = vld [vmem:[%s189] sm:$0xff]
  %v191 = vld [vmem:[%s189 + $0x8] sm:$0xff]
  %v192 = vld [vmem:[%s189 + $0x10] sm:$0xff]
  %193 = vmatpush.msra.mxu0 %v70
  %194 = vmatpush.msra.mxu0 %v67
  %195 = vmatpush.msra.mxu0 %v64
  %196 = vmatpush.msra.mxu0 %v61
  %197 = vmatpush.msra.mxu0 %v58
  %198 = vmatpush.msra.mxu0 %v55
  %199 = vmatpush.msra.mxu0 %v52
  %200 = vmatpush.msra.mxu0 %v49
  %201 = vmatpush.msra.mxu0 %v46
  %202 = vmatpush.msra.mxu0 %v43
  %203 = vmatpush.msra.mxu0 %v40
  %204 = vmatpush.msra.mxu0 %v37
  %205 = vmatpush.msra.mxu0 %v34
  %206 = vmatpush.msra.mxu0 %v31
  %207 = vmatpush.msra.mxu0 %v28
  %208 = vmatpush.msra.mxu0 %v25
  %209 = vmatmul.f32.gmra.mxu0 %v187
  %v210 = vpop.f32.mrf.mxu0
  %v211 = vadd.f32 0.0, %v210
  %212 = vdwg.mxu0
  %213 = vmatpush.msra.mxu0 %v71
  %214 = vmatpush.msra.mxu0 %v68
  %215 = vmatpush.msra.mxu0 %v65
  %216 = vmatpush.msra.mxu0 %v62
  %217 = vmatpush.msra.mxu0 %v59
  %218 = vmatpush.msra.mxu0 %v56
  %219 = vmatpush.msra.mxu0 %v53
  %220 = vmatpush.msra.mxu0 %v50
  %221 = vmatpush.msra.mxu0 %v47
  %222 = vmatpush.msra.mxu0 %v44
  %223 = vmatpush.msra.mxu0 %v41
  %224 = vmatpush.msra.mxu0 %v38
  %225 = vmatpush.msra.mxu0 %v35
  %226 = vmatpush.msra.mxu0 %v32
  %227 = vmatpush.msra.mxu0 %v29
  %228 = vmatpush.msra.mxu0 %v26
  %229 = vmatmul.f32.gmra.mxu0 %v187
  %v230 = vpop.f32.mrf.mxu0
  %v231 = vadd.f32 0.0, %v230
  %232 = vdwg.mxu0
  %233 = vmatpush.msra.mxu0 %v72
  %234 = vmatpush.msra.mxu0 %v69
  %235 = vmatpush.msra.mxu0 %v66
  %236 = vmatpush.msra.mxu0 %v63
  %237 = vmatpush.msra.mxu0 %v60
  %238 = vmatpush.msra.mxu0 %v57
  %239 = vmatpush.msra.mxu0 %v54
  %240 = vmatpush.msra.mxu0 %v51
  %241 = vmatpush.msra.mxu0 %v48
  %242 = vmatpush.msra.mxu0 %v45
  %243 = vmatpush.msra.mxu0 %v42
  %244 = vmatpush.msra.mxu0 %v39
  %245 = vmatpush.msra.mxu0 %v36
  %246 = vmatpush.msra.mxu0 %v33
  %247 = vmatpush.msra.mxu0 %v30
  %248 = vmatpush.msra.mxu0 %v27
  %249 = vmatmul.f32.gmra.mxu0 %v187
  %v250 = vpop.f32.mrf.mxu0
  %v251 = vadd.f32 0.0, %v250
  %252 = vdwg.mxu0
  %v253 = vadd.f32 %v190, %v211
  %v254 = vadd.f32 %v191, %v231
  %v255 = vxor.u32 %v253, 2147483648
  %v256 = vxor.u32 %v254, 2147483648
  %v257 = vmul.f32 %v255, 1.442695
  %v258 = vpow.pop %v257
  %v259 = vmul.f32 %v256, 1.442695
  %v260 = vpow.pop %v259
  %v261 = vadd.f32 %v258, 1.0
  %v262 = vadd.f32 %v260, 1.0
  %v263 = vrcp.pop %v261
  %v264 = vmul.f32 %v261, %v263
  %v265 = vsub.f32 1.0, %v264
  %v266 = vmul.f32 %v263, %v265
  %v267 = vadd.f32 %v263, %v266
  %vm268 = vweird.f32 %v261
  %vm269 = vweird.f32 %v263
  %vm270 = vmor %vm268, %vm269
  %v271 = vsel %vm270, %v263, %v267
  %v272 = vand.u32 2147483647, %v261
  %vm273 = vcmp.eq.f32.partialorder %v272, 8.507059e+37
  %v274 = vand.u32 %v261, 2147483648
  %v275 = vor.u32 1.1754944e-38, %v274
  %v276 = vsel %vm273, %v275, %v271
  %v277 = vmul.f32 1.0, %v276
  %v278 = vrcp.pop %v262
  %v279 = vmul.f32 %v262, %v278
  %v280 = vsub.f32 1.0, %v279
  %v281 = vmul.f32 %v278, %v280
  %v282 = vadd.f32 %v278, %v281
  %vm283 = vweird.f32 %v262
  %vm284 = vweird.f32 %v278
  %vm285 = vmor %vm283, %vm284
  %v286 = vsel %vm285, %v278, %v282
  %v287 = vand.u32 2147483647, %v262
  %vm288 = vcmp.eq.f32.partialorder %v287, 8.507059e+37
  %v289 = vand.u32 %v262, 2147483648
  %v290 = vor.u32 1.1754944e-38, %v289
  %v291 = vsel %vm288, %v290, %v286
  %v292 = vmul.f32 1.0, %v291
  %v293 = vadd.f32 %v251, %v75
  %v294 = vmul.f32 %v277, %v293
  %v295 = vadd.f32 %v192, %v294
  %v296 = vtanh.pop %v295
  %v297 = vsub.f32 %v187, %v296
  %v298 = vmul.f32 %v292, %v297
  %v299 = vadd.f32 %v296, %v298
  %s300 = scalar_lea.vmem %s4, 8
  %301 = vst [vmem:[%s300] sm:$0xff] %v299
  %s302 = scalar_lea.vmem %s0, 48
  %v303 = vld [vmem:[%s302] sm:$0xff]
  %v304 = vld [vmem:[%s302 + $0x8] sm:$0xff]
  %v305 = vld [vmem:[%s302 + $0x10] sm:$0xff]
  %306 = vmatpush.msra.mxu0 %v70
  %307 = vmatpush.msra.mxu0 %v67
  %308 = vmatpush.msra.mxu0 %v64
  %309 = vmatpush.msra.mxu0 %v61
  %310 = vmatpush.msra.mxu0 %v58
  %311 = vmatpush.msra.mxu0 %v55
  %312 = vmatpush.msra.mxu0 %v52
  %313 = vmatpush.msra.mxu0 %v49
  %314 = vmatpush.msra.mxu0 %v46
  %315 = vmatpush.msra.mxu0 %v43
  %316 = vmatpush.msra.mxu0 %v40
  %317 = vmatpush.msra.mxu0 %v37
  %318 = vmatpush.msra.mxu0 %v34
  %319 = vmatpush.msra.mxu0 %v31
  %320 = vmatpush.msra.mxu0 %v28
  %321 = vmatpush.msra.mxu0 %v25
  %322 = vmatmul.f32.gmra.mxu0 %v299
  %v323 = vpop.f32.mrf.mxu0
  %v324 = vadd.f32 0.0, %v323
  %325 = vdwg.mxu0
  %326 = vmatpush.msra.mxu0 %v71
  %327 = vmatpush.msra.mxu0 %v68
  %328 = vmatpush.msra.mxu0 %v65
  %329 = vmatpush.msra.mxu0 %v62
  %330 = vmatpush.msra.mxu0 %v59
  %331 = vmatpush.msra.mxu0 %v56
  %332 = vmatpush.msra.mxu0 %v53
  %333 = vmatpush.msra.mxu0 %v50
  %334 = vmatpush.msra.mxu0 %v47
  %335 = vmatpush.msra.mxu0 %v44
  %336 = vmatpush.msra.mxu0 %v41
  %337 = vmatpush.msra.mxu0 %v38
  %338 = vmatpush.msra.mxu0 %v35
  %339 = vmatpush.msra.mxu0 %v32
  %340 = vmatpush.msra.mxu0 %v29
  %341 = vmatpush.msra.mxu0 %v26
  %342 = vmatmul.f32.gmra.mxu0 %v299
  %v343 = vpop.f32.mrf.mxu0
  %v344 = vadd.f32 0.0, %v343
  %345 = vdwg.mxu0
  %346 = vmatpush.msra.mxu0 %v72
  %347 = vmatpush.msra.mxu0 %v69
  %348 = vmatpush.msra.mxu0 %v66
  %349 = vmatpush.msra.mxu0 %v63
  %350 = vmatpush.msra.mxu0 %v60
  %351 = vmatpush.msra.mxu0 %v57
  %352 = vmatpush.msra.mxu0 %v54
  %353 = vmatpush.msra.mxu0 %v51
  %354 = vmatpush.msra.mxu0 %v48
  %355 = vmatpush.msra.mxu0 %v45
  %356 = vmatpush.msra.mxu0 %v42
  %357 = vmatpush.msra.mxu0 %v39
  %358 = vmatpush.msra.mxu0 %v36
  %359 = vmatpush.msra.mxu0 %v33
  %360 = vmatpush.msra.mxu0 %v30
  %361 = vmatpush.msra.mxu0 %v27
  %362 = vmatmul.f32.gmra.mxu0 %v299
  %v363 = vpop.f32.mrf.mxu0
  %v364 = vadd.f32 0.0, %v363
  %365 = vdwg.mxu0
  %v366 = vadd.f32 %v303, %v324
  %v367 = vadd.f32 %v304, %v344
  %v368 = vxor.u32 %v366, 2147483648
  %v369 = vxor.u32 %v367, 2147483648
  %v370 = vmul.f32 %v368, 1.442695
  %v371 = vpow.pop %v370
  %v372 = vmul.f32 %v369, 1.442695
  %v373 = vpow.pop %v372
  %v374 = vadd.f32 %v371, 1.0
  %v375 = vadd.f32 %v373, 1.0
  %v376 = vrcp.pop %v374
  %v377 = vmul.f32 %v374, %v376
  %v378 = vsub.f32 1.0, %v377
  %v379 = vmul.f32 %v376, %v378
  %v380 = vadd.f32 %v376, %v379
  %vm381 = vweird.f32 %v374
  %vm382 = vweird.f32 %v376
  %vm383 = vmor %vm381, %vm382
  %v384 = vsel %vm383, %v376, %v380
  %v385 = vand.u32 2147483647, %v374
  %vm386 = vcmp.eq.f32.partialorder %v385, 8.507059e+37
  %v387 = vand.u32 %v374, 2147483648
  %v388 = vor.u32 1.1754944e-38, %v387
  %v389 = vsel %vm386, %v388, %v384
  %v390 = vmul.f32 1.0, %v389
  %v391 = vrcp.pop %v375
  %v392 = vmul.f32 %v375, %v391
  %v393 = vsub.f32 1.0, %v392
  %v394 = vmul.f32 %v391, %v393
  %v395 = vadd.f32 %v391, %v394
  %vm396 = vweird.f32 %v375
  %vm397 = vweird.f32 %v391
  %vm398 = vmor %vm396, %vm397
  %v399 = vsel %vm398, %v391, %v395
  %v400 = vand.u32 2147483647, %v375
  %vm401 = vcmp.eq.f32.partialorder %v400, 8.507059e+37
  %v402 = vand.u32 %v375, 2147483648
  %v403 = vor.u32 1.1754944e-38, %v402
  %v404 = vsel %vm401, %v403, %v399
  %v405 = vmul.f32 1.0, %v404
  %v406 = vadd.f32 %v364, %v75
  %v407 = vmul.f32 %v390, %v406
  %v408 = vadd.f32 %v305, %v407
  %v409 = vtanh.pop %v408
  %v410 = vsub.f32 %v299, %v409
  %v411 = vmul.f32 %v405, %v410
  %v412 = vadd.f32 %v409, %v411
  %s413 = scalar_lea.vmem %s4, 16
  %414 = vst [vmem:[%s413] sm:$0xff] %v412
  %s415 = scalar_lea.vmem %s0, 72
  %v416 = vld [vmem:[%s415] sm:$0xff]
  %v417 = vld [vmem:[%s415 + $0x8] sm:$0xff]
  %v418 = vld [vmem:[%s415 + $0x10] sm:$0xff]
  %419 = vmatpush.msra.mxu0 %v70
  %420 = vmatpush.msra.mxu0 %v67
  %421 = vmatpush.msra.mxu0 %v64
  %422 = vmatpush.msra.mxu0 %v61
  %423 = vmatpush.msra.mxu0 %v58
  %424 = vmatpush.msra.mxu0 %v55
  %425 = vmatpush.msra.mxu0 %v52
  %426 = vmatpush.msra.mxu0 %v49
  %427 = vmatpush.msra.mxu0 %v46
  %428 = vmatpush.msra.mxu0 %v43
  %429 = vmatpush.msra.mxu0 %v40
  %430 = vmatpush.msra.mxu0 %v37
  %431 = vmatpush.msra.mxu0 %v34
  %432 = vmatpush.msra.mxu0 %v31
  %433 = vmatpush.msra.mxu0 %v28
  %434 = vmatpush.msra.mxu0 %v25
  %435 = vmatmul.f32.gmra.mxu0 %v412
  %v436 = vpop.f32.mrf.mxu0
  %v437 = vadd.f32 0.0, %v436
  %438 = vdwg.mxu0
  %439 = vmatpush.msra.mxu0 %v71
  %440 = vmatpush.msra.mxu0 %v68
  %441 = vmatpush.msra.mxu0 %v65
  %442 = vmatpush.msra.mxu0 %v62
  %443 = vmatpush.msra.mxu0 %v59
  %444 = vmatpush.msra.mxu0 %v56
  %445 = vmatpush.msra.mxu0 %v53
  %446 = vmatpush.msra.mxu0 %v50
  %447 = vmatpush.msra.mxu0 %v47
  %448 = vmatpush.msra.mxu0 %v44
  %449 = vmatpush.msra.mxu0 %v41
  %450 = vmatpush.msra.mxu0 %v38
  %451 = vmatpush.msra.mxu0 %v35
  %452 = vmatpush.msra.mxu0 %v32
  %453 = vmatpush.msra.mxu0 %v29
  %454 = vmatpush.msra.mxu0 %v26
  %455 = vmatmul.f32.gmra.mxu0 %v412
  %v456 = vpop.f32.mrf.mxu0
  %v457 = vadd.f32 0.0, %v456
  %458 = vdwg.mxu0
  %459 = vmatpush.msra.mxu0 %v72
  %460 = vmatpush.msra.mxu0 %v69
  %461 = vmatpush.msra.mxu0 %v66
  %462 = vmatpush.msra.mxu0 %v63
  %463 = vmatpush.msra.mxu0 %v60
  %464 = vmatpush.msra.mxu0 %v57
  %465 = vmatpush.msra.mxu0 %v54
  %466 = vmatpush.msra.mxu0 %v51
  %467 = vmatpush.msra.mxu0 %v48
  %468 = vmatpush.msra.mxu0 %v45
  %469 = vmatpush.msra.mxu0 %v42
  %470 = vmatpush.msra.mxu0 %v39
  %471 = vmatpush.msra.mxu0 %v36
  %472 = vmatpush.msra.mxu0 %v33
  %473 = vmatpush.msra.mxu0 %v30
  %474 = vmatpush.msra.mxu0 %v27
  %475 = vmatmul.f32.gmra.mxu0 %v412
  %v476 = vpop.f32.mrf.mxu0
  %v477 = vadd.f32 0.0, %v476
  %478 = vdwg.mxu0
  %v479 = vadd.f32 %v416, %v437
  %v480 = vadd.f32 %v417, %v457
  %v481 = vxor.u32 %v479, 2147483648
  %v482 = vxor.u32 %v480, 2147483648
  %v483 = vmul.f32 %v481, 1.442695
  %v484 = vpow.pop %v483
  %v485 = vmul.f32 %v482, 1.442695
  %v486 = vpow.pop %v485
  %v487 = vadd.f32 %v484, 1.0
  %v488 = vadd.f32 %v486, 1.0
  %v489 = vrcp.pop %v487
  %v490 = vmul.f32 %v487, %v489
  %v491 = vsub.f32 1.0, %v490
  %v492 = vmul.f32 %v489, %v491
  %v493 = vadd.f32 %v489, %v492
  %vm494 = vweird.f32 %v487
  %vm495 = vweird.f32 %v489
  %vm496 = vmor %vm494, %vm495
  %v497 = vsel %vm496, %v489, %v493
  %v498 = vand.u32 2147483647, %v487
  %vm499 = vcmp.eq.f32.partialorder %v498, 8.507059e+37
  %v500 = vand.u32 %v487, 2147483648
  %v501 = vor.u32 1.1754944e-38, %v500
  %v502 = vsel %vm499, %v501, %v497
  %v503 = vmul.f32 1.0, %v502
  %v504 = vrcp.pop %v488
  %v505 = vmul.f32 %v488, %v504
  %v506 = vsub.f32 1.0, %v505
  %v507 = vmul.f32 %v504, %v506
  %v508 = vadd.f32 %v504, %v507
  %vm509 = vweird.f32 %v488
  %vm510 = vweird.f32 %v504
  %vm511 = vmor %vm509, %vm510
  %v512 = vsel %vm511, %v504, %v508
  %v513 = vand.u32 2147483647, %v488
  %vm514 = vcmp.eq.f32.partialorder %v513, 8.507059e+37
  %v515 = vand.u32 %v488, 2147483648
  %v516 = vor.u32 1.1754944e-38, %v515
  %v517 = vsel %vm514, %v516, %v512
  %v518 = vmul.f32 1.0, %v517
  %v519 = vadd.f32 %v477, %v75
  %v520 = vmul.f32 %v503, %v519
  %v521 = vadd.f32 %v418, %v520
  %v522 = vtanh.pop %v521
  %v523 = vsub.f32 %v412, %v522
  %v524 = vmul.f32 %v518, %v523
  %v525 = vadd.f32 %v522, %v524
  %s526 = scalar_lea.vmem %s4, 24
  %527 = vst [vmem:[%s526] sm:$0xff] %v525
  %s528 = scalar_lea.vmem %s0, 96
  %v529 = vld [vmem:[%s528] sm:$0xff]
  %v530 = vld [vmem:[%s528 + $0x8] sm:$0xff]
  %v531 = vld [vmem:[%s528 + $0x10] sm:$0xff]
  %532 = vmatpush.msra.mxu0 %v70
  %533 = vmatpush.msra.mxu0 %v67
  %534 = vmatpush.msra.mxu0 %v64
  %535 = vmatpush.msra.mxu0 %v61
  %536 = vmatpush.msra.mxu0 %v58
  %537 = vmatpush.msra.mxu0 %v55
  %538 = vmatpush.msra.mxu0 %v52
  %539 = vmatpush.msra.mxu0 %v49
  %540 = vmatpush.msra.mxu0 %v46
  %541 = vmatpush.msra.mxu0 %v43
  %542 = vmatpush.msra.mxu0 %v40
  %543 = vmatpush.msra.mxu0 %v37
  %544 = vmatpush.msra.mxu0 %v34
  %545 = vmatpush.msra.mxu0 %v31
  %546 = vmatpush.msra.mxu0 %v28
  %547 = vmatpush.msra.mxu0 %v25
  %548 = vmatmul.f32.gmra.mxu0 %v525
  %v549 = vpop.f32.mrf.mxu0
  %v550 = vadd.f32 0.0, %v549
  %551 = vdwg.mxu0
  %552 = vmatpush.msra.mxu0 %v71
  %553 = vmatpush.msra.mxu0 %v68
  %554 = vmatpush.msra.mxu0 %v65
  %555 = vmatpush.msra.mxu0 %v62
  %556 = vmatpush.msra.mxu0 %v59
  %557 = vmatpush.msra.mxu0 %v56
  %558 = vmatpush.msra.mxu0 %v53
  %559 = vmatpush.msra.mxu0 %v50
  %560 = vmatpush.msra.mxu0 %v47
  %561 = vmatpush.msra.mxu0 %v44
  %562 = vmatpush.msra.mxu0 %v41
  %563 = vmatpush.msra.mxu0 %v38
  %564 = vmatpush.msra.mxu0 %v35
  %565 = vmatpush.msra.mxu0 %v32
  %566 = vmatpush.msra.mxu0 %v29
  %567 = vmatpush.msra.mxu0 %v26
  %568 = vmatmul.f32.gmra.mxu0 %v525
  %v569 = vpop.f32.mrf.mxu0
  %v570 = vadd.f32 0.0, %v569
  %571 = vdwg.mxu0
  %572 = vmatpush.msra.mxu0 %v72
  %573 = vmatpush.msra.mxu0 %v69
  %574 = vmatpush.msra.mxu0 %v66
  %575 = vmatpush.msra.mxu0 %v63
  %576 = vmatpush.msra.mxu0 %v60
  %577 = vmatpush.msra.mxu0 %v57
  %578 = vmatpush.msra.mxu0 %v54
  %579 = vmatpush.msra.mxu0 %v51
  %580 = vmatpush.msra.mxu0 %v48
  %581 = vmatpush.msra.mxu0 %v45
  %582 = vmatpush.msra.mxu0 %v42
  %583 = vmatpush.msra.mxu0 %v39
  %584 = vmatpush.msra.mxu0 %v36
  %585 = vmatpush.msra.mxu0 %v33
  %586 = vmatpush.msra.mxu0 %v30
  %587 = vmatpush.msra.mxu0 %v27
  %588 = vmatmul.f32.gmra.mxu0 %v525
  %v589 = vpop.f32.mrf.mxu0
  %v590 = vadd.f32 0.0, %v589
  %591 = vdwg.mxu0
  %v592 = vadd.f32 %v529, %v550
  %v593 = vadd.f32 %v530, %v570
  %v594 = vxor.u32 %v592, 2147483648
  %v595 = vxor.u32 %v593, 2147483648
  %v596 = vmul.f32 %v594, 1.442695
  %v597 = vpow.pop %v596
  %v598 = vmul.f32 %v595, 1.442695
  %v599 = vpow.pop %v598
  %v600 = vadd.f32 %v597, 1.0
  %v601 = vadd.f32 %v599, 1.0
  %v602 = vrcp.pop %v600
  %v603 = vmul.f32 %v600, %v602
  %v604 = vsub.f32 1.0, %v603
  %v605 = vmul.f32 %v602, %v604
  %v606 = vadd.f32 %v602, %v605
  %vm607 = vweird.f32 %v600
  %vm608 = vweird.f32 %v602
  %vm609 = vmor %vm607, %vm608
  %v610 = vsel %vm609, %v602, %v606
  %v611 = vand.u32 2147483647, %v600
  %vm612 = vcmp.eq.f32.partialorder %v611, 8.507059e+37
  %v613 = vand.u32 %v600, 2147483648
  %v614 = vor.u32 1.1754944e-38, %v613
  %v615 = vsel %vm612, %v614, %v610
  %v616 = vmul.f32 1.0, %v615
  %v617 = vrcp.pop %v601
  %v618 = vmul.f32 %v601, %v617
  %v619 = vsub.f32 1.0, %v618
  %v620 = vmul.f32 %v617, %v619
  %v621 = vadd.f32 %v617, %v620
  %vm622 = vweird.f32 %v601
  %vm623 = vweird.f32 %v617
  %vm624 = vmor %vm622, %vm623
  %v625 = vsel %vm624, %v617, %v621
  %v626 = vand.u32 2147483647, %v601
  %vm627 = vcmp.eq.f32.partialorder %v626, 8.507059e+37
  %v628 = vand.u32 %v601, 2147483648
  %v629 = vor.u32 1.1754944e-38, %v628
  %v630 = vsel %vm627, %v629, %v625
  %v631 = vmul.f32 1.0, %v630
  %v632 = vadd.f32 %v590, %v75
  %v633 = vmul.f32 %v616, %v632
  %v634 = vadd.f32 %v531, %v633
  %v635 = vtanh.pop %v634
  %v636 = vsub.f32 %v525, %v635
  %v637 = vmul.f32 %v631, %v636
  %v638 = vadd.f32 %v635, %v637
  %s639 = scalar_lea.vmem %s4, 32
  %640 = vst [vmem:[%s639] sm:$0xff] %v638
  %s641 = scalar_lea.vmem %s0, 120
  %v642 = vld [vmem:[%s641] sm:$0xff]
  %v643 = vld [vmem:[%s641 + $0x8] sm:$0xff]
  %v644 = vld [vmem:[%s641 + $0x10] sm:$0xff]
  %645 = vmatpush.msra.mxu0 %v70
  %646 = vmatpush.msra.mxu0 %v67
  %647 = vmatpush.msra.mxu0 %v64
  %648 = vmatpush.msra.mxu0 %v61
  %649 = vmatpush.msra.mxu0 %v58
  %650 = vmatpush.msra.mxu0 %v55
  %651 = vmatpush.msra.mxu0 %v52
  %652 = vmatpush.msra.mxu0 %v49
  %653 = vmatpush.msra.mxu0 %v46
  %654 = vmatpush.msra.mxu0 %v43
  %655 = vmatpush.msra.mxu0 %v40
  %656 = vmatpush.msra.mxu0 %v37
  %657 = vmatpush.msra.mxu0 %v34
  %658 = vmatpush.msra.mxu0 %v31
  %659 = vmatpush.msra.mxu0 %v28
  %660 = vmatpush.msra.mxu0 %v25
  %661 = vmatmul.f32.gmra.mxu0 %v638
  %v662 = vpop.f32.mrf.mxu0
  %v663 = vadd.f32 0.0, %v662
  %664 = vdwg.mxu0
  %665 = vmatpush.msra.mxu0 %v71
  %666 = vmatpush.msra.mxu0 %v68
  %667 = vmatpush.msra.mxu0 %v65
  %668 = vmatpush.msra.mxu0 %v62
  %669 = vmatpush.msra.mxu0 %v59
  %670 = vmatpush.msra.mxu0 %v56
  %671 = vmatpush.msra.mxu0 %v53
  %672 = vmatpush.msra.mxu0 %v50
  %673 = vmatpush.msra.mxu0 %v47
  %674 = vmatpush.msra.mxu0 %v44
  %675 = vmatpush.msra.mxu0 %v41
  %676 = vmatpush.msra.mxu0 %v38
  %677 = vmatpush.msra.mxu0 %v35
  %678 = vmatpush.msra.mxu0 %v32
  %679 = vmatpush.msra.mxu0 %v29
  %680 = vmatpush.msra.mxu0 %v26
  %681 = vmatmul.f32.gmra.mxu0 %v638
  %v682 = vpop.f32.mrf.mxu0
  %v683 = vadd.f32 0.0, %v682
  %684 = vdwg.mxu0
  %685 = vmatpush.msra.mxu0 %v72
  %686 = vmatpush.msra.mxu0 %v69
  %687 = vmatpush.msra.mxu0 %v66
  %688 = vmatpush.msra.mxu0 %v63
  %689 = vmatpush.msra.mxu0 %v60
  %690 = vmatpush.msra.mxu0 %v57
  %691 = vmatpush.msra.mxu0 %v54
  %692 = vmatpush.msra.mxu0 %v51
  %693 = vmatpush.msra.mxu0 %v48
  %694 = vmatpush.msra.mxu0 %v45
  %695 = vmatpush.msra.mxu0 %v42
  %696 = vmatpush.msra.mxu0 %v39
  %697 = vmatpush.msra.mxu0 %v36
  %698 = vmatpush.msra.mxu0 %v33
  %699 = vmatpush.msra.mxu0 %v30
  %700 = vmatpush.msra.mxu0 %v27
  %701 = vmatmul.f32.gmra.mxu0 %v638
  %v702 = vpop.f32.mrf.mxu0
  %v703 = vadd.f32 0.0, %v702
  %704 = vdwg.mxu0
  %v705 = vadd.f32 %v642, %v663
  %v706 = vadd.f32 %v643, %v683
  %v707 = vxor.u32 %v705, 2147483648
  %v708 = vxor.u32 %v706, 2147483648
  %v709 = vmul.f32 %v707, 1.442695
  %v710 = vpow.pop %v709
  %v711 = vmul.f32 %v708, 1.442695
  %v712 = vpow.pop %v711
  %v713 = vadd.f32 %v710, 1.0
  %v714 = vadd.f32 %v712, 1.0
  %v715 = vrcp.pop %v713
  %v716 = vmul.f32 %v713, %v715
  %v717 = vsub.f32 1.0, %v716
  %v718 = vmul.f32 %v715, %v717
  %v719 = vadd.f32 %v715, %v718
  %vm720 = vweird.f32 %v713
  %vm721 = vweird.f32 %v715
  %vm722 = vmor %vm720, %vm721
  %v723 = vsel %vm722, %v715, %v719
  %v724 = vand.u32 2147483647, %v713
  %vm725 = vcmp.eq.f32.partialorder %v724, 8.507059e+37
  %v726 = vand.u32 %v713, 2147483648
  %v727 = vor.u32 1.1754944e-38, %v726
  %v728 = vsel %vm725, %v727, %v723
  %v729 = vmul.f32 1.0, %v728
  %v730 = vrcp.pop %v714
  %v731 = vmul.f32 %v714, %v730
  %v732 = vsub.f32 1.0, %v731
  %v733 = vmul.f32 %v730, %v732
  %v734 = vadd.f32 %v730, %v733
  %vm735 = vweird.f32 %v714
  %vm736 = vweird.f32 %v730
  %vm737 = vmor %vm735, %vm736
  %v738 = vsel %vm737, %v730, %v734
  %v739 = vand.u32 2147483647, %v714
  %vm740 = vcmp.eq.f32.partialorder %v739, 8.507059e+37
  %v741 = vand.u32 %v714, 2147483648
  %v742 = vor.u32 1.1754944e-38, %v741
  %v743 = vsel %vm740, %v742, %v738
  %v744 = vmul.f32 1.0, %v743
  %v745 = vadd.f32 %v703, %v75
  %v746 = vmul.f32 %v729, %v745
  %v747 = vadd.f32 %v644, %v746
  %v748 = vtanh.pop %v747
  %v749 = vsub.f32 %v638, %v748
  %v750 = vmul.f32 %v744, %v749
  %v751 = vadd.f32 %v748, %v750
  %s752 = scalar_lea.vmem %s4, 40
  %753 = vst [vmem:[%s752] sm:$0xff] %v751
  %s754 = scalar_lea.vmem %s0, 144
  %v755 = vld [vmem:[%s754] sm:$0xff]
  %v756 = vld [vmem:[%s754 + $0x8] sm:$0xff]
  %v757 = vld [vmem:[%s754 + $0x10] sm:$0xff]
  %758 = vmatpush.msra.mxu0 %v70
  %759 = vmatpush.msra.mxu0 %v67
  %760 = vmatpush.msra.mxu0 %v64
  %761 = vmatpush.msra.mxu0 %v61
  %762 = vmatpush.msra.mxu0 %v58
  %763 = vmatpush.msra.mxu0 %v55
  %764 = vmatpush.msra.mxu0 %v52
  %765 = vmatpush.msra.mxu0 %v49
  %766 = vmatpush.msra.mxu0 %v46
  %767 = vmatpush.msra.mxu0 %v43
  %768 = vmatpush.msra.mxu0 %v40
  %769 = vmatpush.msra.mxu0 %v37
  %770 = vmatpush.msra.mxu0 %v34
  %771 = vmatpush.msra.mxu0 %v31
  %772 = vmatpush.msra.mxu0 %v28
  %773 = vmatpush.msra.mxu0 %v25
  %774 = vmatmul.f32.gmra.mxu0 %v751
  %v775 = vpop.f32.mrf.mxu0
  %v776 = vadd.f32 0.0, %v775
  %777 = vdwg.mxu0
  %778 = vmatpush.msra.mxu0 %v71
  %779 = vmatpush.msra.mxu0 %v68
  %780 = vmatpush.msra.mxu0 %v65
  %781 = vmatpush.msra.mxu0 %v62
  %782 = vmatpush.msra.mxu0 %v59
  %783 = vmatpush.msra.mxu0 %v56
  %784 = vmatpush.msra.mxu0 %v53
  %785 = vmatpush.msra.mxu0 %v50
  %786 = vmatpush.msra.mxu0 %v47
  %787 = vmatpush.msra.mxu0 %v44
  %788 = vmatpush.msra.mxu0 %v41
  %789 = vmatpush.msra.mxu0 %v38
  %790 = vmatpush.msra.mxu0 %v35
  %791 = vmatpush.msra.mxu0 %v32
  %792 = vmatpush.msra.mxu0 %v29
  %793 = vmatpush.msra.mxu0 %v26
  %794 = vmatmul.f32.gmra.mxu0 %v751
  %v795 = vpop.f32.mrf.mxu0
  %v796 = vadd.f32 0.0, %v795
  %797 = vdwg.mxu0
  %798 = vmatpush.msra.mxu0 %v72
  %799 = vmatpush.msra.mxu0 %v69
  %800 = vmatpush.msra.mxu0 %v66
  %801 = vmatpush.msra.mxu0 %v63
  %802 = vmatpush.msra.mxu0 %v60
  %803 = vmatpush.msra.mxu0 %v57
  %804 = vmatpush.msra.mxu0 %v54
  %805 = vmatpush.msra.mxu0 %v51
  %806 = vmatpush.msra.mxu0 %v48
  %807 = vmatpush.msra.mxu0 %v45
  %808 = vmatpush.msra.mxu0 %v42
  %809 = vmatpush.msra.mxu0 %v39
  %810 = vmatpush.msra.mxu0 %v36
  %811 = vmatpush.msra.mxu0 %v33
  %812 = vmatpush.msra.mxu0 %v30
  %813 = vmatpush.msra.mxu0 %v27
  %814 = vmatmul.f32.gmra.mxu0 %v751
  %v815 = vpop.f32.mrf.mxu0
  %v816 = vadd.f32 0.0, %v815
  %817 = vdwg.mxu0
  %v818 = vadd.f32 %v755, %v776
  %v819 = vadd.f32 %v756, %v796
  %v820 = vxor.u32 %v818, 2147483648
  %v821 = vxor.u32 %v819, 2147483648
  %v822 = vmul.f32 %v820, 1.442695
  %v823 = vpow.pop %v822
  %v824 = vmul.f32 %v821, 1.442695
  %v825 = vpow.pop %v824
  %v826 = vadd.f32 %v823, 1.0
  %v827 = vadd.f32 %v825, 1.0
  %v828 = vrcp.pop %v826
  %v829 = vmul.f32 %v826, %v828
  %v830 = vsub.f32 1.0, %v829
  %v831 = vmul.f32 %v828, %v830
  %v832 = vadd.f32 %v828, %v831
  %vm833 = vweird.f32 %v826
  %vm834 = vweird.f32 %v828
  %vm835 = vmor %vm833, %vm834
  %v836 = vsel %vm835, %v828, %v832
  %v837 = vand.u32 2147483647, %v826
  %vm838 = vcmp.eq.f32.partialorder %v837, 8.507059e+37
  %v839 = vand.u32 %v826, 2147483648
  %v840 = vor.u32 1.1754944e-38, %v839
  %v841 = vsel %vm838, %v840, %v836
  %v842 = vmul.f32 1.0, %v841
  %v843 = vrcp.pop %v827
  %v844 = vmul.f32 %v827, %v843
  %v845 = vsub.f32 1.0, %v844
  %v846 = vmul.f32 %v843, %v845
  %v847 = vadd.f32 %v843, %v846
  %vm848 = vweird.f32 %v827
  %vm849 = vweird.f32 %v843
  %vm850 = vmor %vm848, %vm849
  %v851 = vsel %vm850, %v843, %v847
  %v852 = vand.u32 2147483647, %v827
  %vm853 = vcmp.eq.f32.partialorder %v852, 8.507059e+37
  %v854 = vand.u32 %v827, 2147483648
  %v855 = vor.u32 1.1754944e-38, %v854
  %v856 = vsel %vm853, %v855, %v851
  %v857 = vmul.f32 1.0, %v856
  %v858 = vadd.f32 %v816, %v75
  %v859 = vmul.f32 %v842, %v858
  %v860 = vadd.f32 %v757, %v859
  %v861 = vtanh.pop %v860
  %v862 = vsub.f32 %v751, %v861
  %v863 = vmul.f32 %v857, %v862
  %v864 = vadd.f32 %v861, %v863
  %s865 = scalar_lea.vmem %s4, 48
  %866 = vst [vmem:[%s865] sm:$0xff] %v864
  %s867 = scalar_lea.vmem %s0, 168
  %v868 = vld [vmem:[%s867] sm:$0xff]
  %v869 = vld [vmem:[%s867 + $0x8] sm:$0xff]
  %v870 = vld [vmem:[%s867 + $0x10] sm:$0xff]
  %871 = vmatpush.msra.mxu0 %v70
  %872 = vmatpush.msra.mxu0 %v67
  %873 = vmatpush.msra.mxu0 %v64
  %874 = vmatpush.msra.mxu0 %v61
  %875 = vmatpush.msra.mxu0 %v58
  %876 = vmatpush.msra.mxu0 %v55
  %877 = vmatpush.msra.mxu0 %v52
  %878 = vmatpush.msra.mxu0 %v49
  %879 = vmatpush.msra.mxu0 %v46
  %880 = vmatpush.msra.mxu0 %v43
  %881 = vmatpush.msra.mxu0 %v40
  %882 = vmatpush.msra.mxu0 %v37
  %883 = vmatpush.msra.mxu0 %v34
  %884 = vmatpush.msra.mxu0 %v31
  %885 = vmatpush.msra.mxu0 %v28
  %886 = vmatpush.msra.mxu0 %v25
  %887 = vmatmul.f32.gmra.mxu0 %v864
  %v888 = vpop.f32.mrf.mxu0
  %v889 = vadd.f32 0.0, %v888
  %890 = vdwg.mxu0
  %891 = vmatpush.msra.mxu0 %v71
  %892 = vmatpush.msra.mxu0 %v68
  %893 = vmatpush.msra.mxu0 %v65
  %894 = vmatpush.msra.mxu0 %v62
  %895 = vmatpush.msra.mxu0 %v59
  %896 = vmatpush.msra.mxu0 %v56
  %897 = vmatpush.msra.mxu0 %v53
  %898 = vmatpush.msra.mxu0 %v50
  %899 = vmatpush.msra.mxu0 %v47
  %900 = vmatpush.msra.mxu0 %v44
  %901 = vmatpush.msra.mxu0 %v41
  %902 = vmatpush.msra.mxu0 %v38
  %903 = vmatpush.msra.mxu0 %v35
  %904 = vmatpush.msra.mxu0 %v32
  %905 = vmatpush.msra.mxu0 %v29
  %906 = vmatpush.msra.mxu0 %v26
  %907 = vmatmul.f32.gmra.mxu0 %v864
  %v908 = vpop.f32.mrf.mxu0
  %v909 = vadd.f32 0.0, %v908
  %910 = vdwg.mxu0
  %911 = vmatpush.msra.mxu0 %v72
  %912 = vmatpush.msra.mxu0 %v69
  %913 = vmatpush.msra.mxu0 %v66
  %914 = vmatpush.msra.mxu0 %v63
  %915 = vmatpush.msra.mxu0 %v60
  %916 = vmatpush.msra.mxu0 %v57
  %917 = vmatpush.msra.mxu0 %v54
  %918 = vmatpush.msra.mxu0 %v51
  %919 = vmatpush.msra.mxu0 %v48
  %920 = vmatpush.msra.mxu0 %v45
  %921 = vmatpush.msra.mxu0 %v42
  %922 = vmatpush.msra.mxu0 %v39
  %923 = vmatpush.msra.mxu0 %v36
  %924 = vmatpush.msra.mxu0 %v33
  %925 = vmatpush.msra.mxu0 %v30
  %926 = vmatpush.msra.mxu0 %v27
  %927 = vmatmul.f32.gmra.mxu0 %v864
  %v928 = vpop.f32.mrf.mxu0
  %v929 = vadd.f32 0.0, %v928
  %930 = vdwg.mxu0
  %v931 = vadd.f32 %v868, %v889
  %v932 = vadd.f32 %v869, %v909
  %v933 = vxor.u32 %v931, 2147483648
  %v934 = vxor.u32 %v932, 2147483648
  %v935 = vmul.f32 %v933, 1.442695
  %v936 = vpow.pop %v935
  %v937 = vmul.f32 %v934, 1.442695
  %v938 = vpow.pop %v937
  %v939 = vadd.f32 %v936, 1.0
  %v940 = vadd.f32 %v938, 1.0
  %v941 = vrcp.pop %v939
  %v942 = vmul.f32 %v939, %v941
  %v943 = vsub.f32 1.0, %v942
  %v944 = vmul.f32 %v941, %v943
  %v945 = vadd.f32 %v941, %v944
  %vm946 = vweird.f32 %v939
  %vm947 = vweird.f32 %v941
  %vm948 = vmor %vm946, %vm947
  %v949 = vsel %vm948, %v941, %v945
  %v950 = vand.u32 2147483647, %v939
  %vm951 = vcmp.eq.f32.partialorder %v950, 8.507059e+37
  %v952 = vand.u32 %v939, 2147483648
  %v953 = vor.u32 1.1754944e-38, %v952
  %v954 = vsel %vm951, %v953, %v949
  %v955 = vmul.f32 1.0, %v954
  %v956 = vrcp.pop %v940
  %v957 = vmul.f32 %v940, %v956
  %v958 = vsub.f32 1.0, %v957
  %v959 = vmul.f32 %v956, %v958
  %v960 = vadd.f32 %v956, %v959
  %vm961 = vweird.f32 %v940
  %vm962 = vweird.f32 %v956
  %vm963 = vmor %vm961, %vm962
  %v964 = vsel %vm963, %v956, %v960
  %v965 = vand.u32 2147483647, %v940
  %vm966 = vcmp.eq.f32.partialorder %v965, 8.507059e+37
  %v967 = vand.u32 %v940, 2147483648
  %v968 = vor.u32 1.1754944e-38, %v967
  %v969 = vsel %vm966, %v968, %v964
  %v970 = vmul.f32 1.0, %v969
  %v971 = vadd.f32 %v929, %v75
  %v972 = vmul.f32 %v955, %v971
  %v973 = vadd.f32 %v870, %v972
  %v974 = vtanh.pop %v973
  %v975 = vsub.f32 %v864, %v974
  %v976 = vmul.f32 %v970, %v975
  %v977 = vadd.f32 %v974, %v976
  %s978 = scalar_lea.vmem %s4, 56
  %979 = vst [vmem:[%s978] sm:$0xff] %v977
  %980 = vst [vmem:[#allocation2] sm:$0xff] %v977
  // Predicated region
  $region22: #{decoder_rnn_forward.1} parent=0 // pred_check
    %p981 = pneg %p19
  $region23: #{decoder_rnn_forward.1} parent=0 // pred_check_branch
    %983 = sbr.rel (%p981) target = $region25
  $region24: #{decoder_rnn_forward.1} parent=0 // pred_region
    %984 = vst [vmem:[%s5] sm:$0xff] %v977
  $region25: #{decoder_rnn_forward.1} parent=0 // pred_fallthru
    _
  // Predicated region
  $region26: #{decoder_rnn_forward.1} parent=0 // pred_check
    _
  $region27: #{decoder_rnn_forward.1} parent=0 // pred_check_branch
    %986 = sbr.rel (0) target = $region29
  $region28: #{decoder_rnn_forward.1} parent=0 // pred_region
    _
  $region29: #{decoder_rnn_forward.1} parent=0 // pred_fallthru
    _
  // Predicated region
  $region30: #{decoder_rnn_forward.1} parent=0 // pred_check
    _
  $region31: #{decoder_rnn_forward.1} parent=0 // pred_check_branch
    %988 = sbr.rel (0) target = $region33
  $region32: #{decoder_rnn_forward.1} parent=0 // pred_region
    _
  $region33: #{decoder_rnn_forward.1} parent=0 // pred_fallthru
    _
  // Predicated region
  $region34: #{decoder_rnn_forward.1} parent=0 // pred_check
    _
  $region35: #{decoder_rnn_forward.1} parent=0 // pred_check_branch
    %990 = sbr.rel (0) target = $region37
  $region36: #{decoder_rnn_forward.1} parent=0 // pred_region
    _
  $region37: #{decoder_rnn_forward.1} parent=0 // pred_fallthru
    _
  // Predicated region
  $region38: #{decoder_rnn_forward.1} parent=0 // pred_check
    _
  $region39: #{decoder_rnn_forward.1} parent=0 // pred_check_branch
    %992 = sbr.rel (0) target = $region41
  $region40: #{decoder_rnn_forward.1} parent=0 // pred_region
    _
  $region41: #{decoder_rnn_forward.1} parent=0 // pred_fallthru
    _

</llo_original>
